<compile_context>
chip_gen: v7x
topology: tpu7x:2x2x1
jax: 0.10.0
libtpu: 0.0.40
codegen_flags: <defaults>
</compile_context>

<pallas_src>
import functools

import numpy as np
import jax
import jax.numpy as jnp
from jax import lax
from jax.experimental import pallas as pl
from jax.experimental.pallas import tpu as pltpu


def _round_up(x, m):
    return ((x + m - 1) // m) * m


def _cdiv(a, b):
    return -(-a // b)


def _fused_nll_kernel(w_ref, data_ref, eye_ref,
                      w1t_ref, b1_ref, w2t_ref, b2_ref, w3t_ref, b3_ref,
                      out_ref, *, act_dtype):
    """One row-tile of the fused NormalNLL forward pass (feature-major math).

    w_ref    : (TILE_B, F)    f32  latent coefficients (un-gathered, native dtype)
    data_ref : (TILE_B, xd)   f32  targets
    eye_ref  : (xd, xd)       f32  identity, used as an MXU transpose of data
    w{1,2,3}t: transposed fused block-diagonal MLP weights (bf16), VMEM resident
    b{1,2,3} : fused biases as column vectors (f32)
    out_ref  : (1, 1, TILE_B) f32  per-row mean NLL, lane-dense
    """
    f32 = jnp.float32
    bf16 = jnp.bfloat16
    xd = data_ref.shape[-1]
    tile_b = out_ref.shape[-1]

    # Cast the streamed operand in-kernel (VPU cast; no wrapper HBM pass).
    w_bf = w_ref[...].astype(bf16)                               # (TILE_B, F)

    # Layer 1 (gather folded into w1t's column permutation):
    #   h1 = W1^T @ w^T, expressed as A @ B^T on the MXU (q @ k^T pattern).
    h1 = lax.dot_general(w1t_ref[...], w_bf,
                         dimension_numbers=(((1,), (1,)), ((), ())),
                         preferred_element_type=f32) + b1_ref[...]
    h1 = jnp.tanh(h1.astype(act_dtype))                          # (2n, TILE_B)

    h2 = jnp.dot(w2t_ref[...], h1.astype(bf16),
                 preferred_element_type=f32) + b2_ref[...]
    h2 = jnp.tanh(h2.astype(act_dtype))                          # (2n2, TILE_B)

    h3 = jnp.dot(w3t_ref[...], h2.astype(bf16),
                 preferred_element_type=f32) + b3_ref[...]       # (2*xd, TILE_B) f32

    mu = h3[:xd, :]                                              # sublane slice (mult of 8)
    pre = h3[xd:, :]
    # numerically stable softplus; sigma = 10 * softplus(pre)
    sig = 10.0 * (jnp.maximum(pre, 0.0) + jnp.log1p(jnp.exp(-jnp.abs(pre))))
    # TODO(synk): like the PyTorch reference, sigma can underflow toward 0 for very
    # negative pre-activations; no epsilon added, to stay faithful to the module.
    inv_two_sig2 = 0.5 * pl.reciprocal(sig * sig, approx=True)   # EUP slot, ~free

    # Transpose the data tile to feature-major with a tiny identity MXU
    # contraction (A @ B^T); HIGHEST precision keeps data at ~f32 accuracy.
    data_t = lax.dot_general(eye_ref[...], data_ref[...],
                             dimension_numbers=(((1,), (1,)), ((), ())),
                             preferred_element_type=f32,
                             precision=lax.Precision.HIGHEST)    # (xd, TILE_B)

    diff = data_t - mu
    losses = diff * diff * inv_two_sig2 + jnp.log(sig)           # lane-dense

    # Mean over x_dim = cheap sublane (XLU) reduce -> (1, TILE_B) lane-dense.
    mean = jnp.sum(losses, axis=0, keepdims=True) * (1.0 / xd)
    out_ref[...] = mean.reshape(1, 1, tile_b)


def _forward_impl(params, w, data, *, x_dim, n, n2, act_dtype,
                  max_tile_b, vmem_limit):
    lead = w.shape[:-1]
    B = 1
    for s in lead:
        B *= int(s)
    B = max(B, 1)
    F = w.shape[-1]
    xd = x_dim

    # No astype / pad passes on the streamed operands.
    w2d = w.reshape(B, F)
    d2d = data.reshape(B, xd)
    if d2d.dtype != jnp.float32:
        d2d = d2d.astype(jnp.float32)

    # ---- tile policy -----------------------------------------------------
    # Small B: one exact block (block dims == full array dims, always legal).
    # Large B: balanced 128-multiple tiles, >=2 tiles so megacore chips can
    # shard the parallel grid axis; ragged tail = partial last block, sliced
    # off with [:B] below (garbage rows only affect their own lanes).
    if B < 256:
        tile_b, num_tiles = B, 1
    else:
        tile_b = min(max_tile_b, _round_up(_cdiv(B, 2), 128))
        num_tiles = _cdiv(B, tile_b)
        tile_b = _round_up(_cdiv(B, num_tiles), 128)

    flops = 2 * B * (F * 2 * n + 2 * n * 2 * n2 + 2 * n2 * 2 * xd + xd * xd) \
        + 10 * B * xd
    transcendentals = B * (2 * n + 2 * n2 + 4 * xd)
    bytes_accessed = (B * F * 4 + B * xd * 4 + num_tiles * tile_b * 4
                      + 2 * (2 * n * F + 2 * n * 2 * n2 + 2 * n2 * 2 * xd)
                      + 4 * (2 * n + 2 * n2 + 2 * xd + xd * xd))

    grid_spec = pltpu.PrefetchScalarGridSpec(
        num_scalar_prefetch=0,
        grid=(num_tiles,),
        in_specs=[
            pl.BlockSpec((tile_b, F), lambda i: (i, 0)),          # w rows (streamed)
            pl.BlockSpec((tile_b, xd), lambda i: (i, 0)),         # data rows (streamed)
            pl.BlockSpec((xd, xd), lambda i: (0, 0)),             # identity (resident)
            pl.BlockSpec((2 * n, F), lambda i: (0, 0)),           # w1^T (resident)
            pl.BlockSpec((2 * n, 1), lambda i: (0, 0)),           # b1
            pl.BlockSpec((2 * n2, 2 * n), lambda i: (0, 0)),      # w2^T
            pl.BlockSpec((2 * n2, 1), lambda i: (0, 0)),          # b2
            pl.BlockSpec((2 * xd, 2 * n2), lambda i: (0, 0)),     # w3^T
            pl.BlockSpec((2 * xd, 1), lambda i: (0, 0)),          # b3
        ],
        out_specs=pl.BlockSpec((1, 1, tile_b), lambda i: (i, 0, 0)),
    )

    out = pl.pallas_call(
        functools.partial(_fused_nll_kernel, act_dtype=act_dtype),
        out_shape=jax.ShapeDtypeStruct((num_tiles, 1, tile_b), jnp.float32),
        grid_spec=grid_spec,
        compiler_params=pltpu.CompilerParams(
            dimension_semantics=("parallel",),
            vmem_limit_bytes=vmem_limit),
        cost_estimate=pl.CostEstimate(
            flops=flops, transcendentals=transcendentals,
            bytes_accessed=bytes_accessed),
    )(w2d, d2d, params["eye"], params["w1t"], params["b1t"],
      params["w2t"], params["b2t"], params["w3t"], params["b3t"])

    return out.reshape(-1)[:B].reshape(lead)


class NormalNLLPallas:
    """JAX/Pallas reimplementation of the PyTorch NormalNLL forward pass."""

    def __init__(self, x_dim, num_freqs, n=128, n2=64, key=None):
        assert len(num_freqs) == 2, "NormalNLL expects num_freqs=[num_mu, num_sigma]"
        self.x_dim = x_dim
        self.num_freqs = list(num_freqs)
        self.total_freqs = sum(num_freqs)
        self.n = n
        self.n2 = n2

        if key is None:
            key = jax.random.PRNGKey(0)
        ks = jax.random.split(key, 12)

        def linear(kw, kb, fan_in, fan_out):
            bound = 1.0 / np.sqrt(float(fan_in))
            wgt = jax.random.uniform(kw, (fan_in, fan_out), jnp.float32,
                                     minval=-bound, maxval=bound)
            b = jax.random.uniform(kb, (fan_out,), jnp.float32,
                                   minval=-bound, maxval=bound)
            return wgt, b

        nf_mu, nf_sig = self.num_freqs
        self.w1m, self.b1m = linear(ks[0], ks[1], 2 * nf_mu, n)
        self.w2m, self.b2m = linear(ks[2], ks[3], n, n2)
        self.w3m, self.b3m = linear(ks[4], ks[5], n2, x_dim)
        self.w1s, self.b1s = linear(ks[6], ks[7], 2 * nf_sig, n)
        self.w2s, self.b2s = linear(ks[8], ks[9], n, n2)
        self.w3s, self.b3s = linear(ks[10], ks[11], n2, x_dim)

        # ---- fused, transposed (feature-major) block-diagonal weights -------
        # The param_idxs gather is folded into w1^T's column permutation so the
        # original un-gathered w streams straight into the kernel.
        tot = self.total_freqs
        idx_mu = np.concatenate([np.arange(nf_mu), tot + np.arange(nf_mu)])
        idx_sig = np.concatenate([nf_mu + np.arange(nf_sig),
                                  tot + nf_mu + np.arange(nf_sig)])

        w1t = np.zeros((2 * n, 2 * tot), np.float32)
        w1t[:n, idx_mu] = np.asarray(self.w1m).T
        w1t[n:, idx_sig] = np.asarray(self.w1s).T
        w2t = np.zeros((2 * n2, 2 * n), np.float32)
        w2t[:n2, :n] = np.asarray(self.w2m).T
        w2t[n2:, n:] = np.asarray(self.w2s).T
        w3t = np.zeros((2 * x_dim, 2 * n2), np.float32)
        w3t[:x_dim, :n2] = np.asarray(self.w3m).T
        w3t[x_dim:, n2:] = np.asarray(self.w3s).T

        self.params = {
            "w1t": jnp.asarray(w1t, jnp.bfloat16),
            "w2t": jnp.asarray(w2t, jnp.bfloat16),
            "w3t": jnp.asarray(w3t, jnp.bfloat16),
            "b1t": jnp.concatenate([self.b1m, self.b1s]).reshape(2 * n, 1),
            "b2t": jnp.concatenate([self.b2m, self.b2s]).reshape(2 * n2, 1),
            "b3t": jnp.concatenate([self.b3m, self.b3s]).reshape(2 * x_dim, 1),
            "eye": jnp.eye(x_dim, dtype=jnp.float32),
        }

        # ---- generation-aware knobs -----------------------------------------
        kind = ""
        try:
            kind = jax.devices()[0].device_kind.lower()
        except Exception:
            pass
        # bf16 EUP (tanh) on v6 (Trillium) / v7; keep f32 on v5e and older.
        act_dtype = jnp.bfloat16 if ("v6" in kind or "v7" in kind) else jnp.float32

        # params are a traced pytree arg (not baked into the executable).
        self._forward = jax.jit(functools.partial(
            _forward_impl, x_dim=x_dim, n=n, n2=n2, act_dtype=act_dtype,
            max_tile_b=1024, vmem_limit=32 * 1024 * 1024))

    def forward(self, w, data, training_mask=None):
        # training_mask only affects gradient flow in the reference
        # (mu vs mu.detach()); the forward value is identical, so it is ignored.
        del training_mask
        return self._forward(self.params, w, data)

    __call__ = forward

    # pure-JAX f32 reference (mirrors the PyTorch module) for verification
    def forward_ref(self, w, data):
        nf_mu, nf_sig = self.num_freqs
        tot = self.total_freqs
        wf = w.astype(jnp.float32)
        w_mu = jnp.concatenate([wf[..., :nf_mu], wf[..., tot:tot + nf_mu]], axis=-1)
        w_sig = jnp.concatenate([wf[..., nf_mu:nf_mu + nf_sig],
                                 wf[..., tot + nf_mu:tot + nf_mu + nf_sig]], axis=-1)
        y1 = jnp.tanh(w_mu @ self.w1m + self.b1m)
        y2 = jnp.tanh(y1 @ self.w2m + self.b2m)
        mu = y2 @ self.w3m + self.b3m
        z1 = jnp.tanh(w_sig @ self.w1s + self.b1s)
        z2 = jnp.tanh(z1 @ self.w2s + self.b2s)
        sig = 10.0 * jax.nn.softplus(z2 @ self.w3s + self.b3s)
        losses = (data.astype(jnp.float32) - mu) ** 2 / (2.0 * sig ** 2) + jnp.log(sig)
        return jnp.mean(losses, axis=-1)


if __name__ == "__main__":
    key = jax.random.PRNGKey(0)
    k_param, k_w, k_data = jax.random.split(key, 3)

    # small shapes: T=8 temporal snapshots, batch=2, num_freqs=[4,4], x_dim=16
    T, batch = 8, 2
    num_freqs = [4, 4]
    x_dim = 16
    total_freqs = sum(num_freqs)

    model = NormalNLLPallas(x_dim, num_freqs, n=128, n2=64, key=k_param)

    w = jax.random.normal(k_w, (T, batch, 2 * total_freqs), jnp.float32)
    data = jax.random.normal(k_data, (T, batch, x_dim), jnp.float32)

    out = model.forward(w, data)
    jax.block_until_ready(out)

    ref = model.forward_ref(w, data)
    assert out.shape == (T, batch), out.shape
    # bf16 weights/activations + approx reciprocal -> relaxed tolerance vs f32 ref
    max_err = float(jnp.max(jnp.abs(out - ref)))
    assert jnp.allclose(out, ref, atol=1e-2, rtol=1e-2), max_err

    print("KERNEL_OK")
</pallas_src>

<mosaic_0001>
module attributes {stable_mosaic.version = 11 : i64} {
  func.func @_fused_nll_kernel(%arg0: i32, %arg1: memref<16x16xf32, #tpu.memory_space<vmem>>, %arg2: memref<16x16xf32, #tpu.memory_space<vmem>>, %arg3: memref<16x16xf32, #tpu.memory_space<vmem>>, %arg4: memref<256x16xbf16, #tpu.memory_space<vmem>>, %arg5: memref<256x1xf32, #tpu.memory_space<vmem>>, %arg6: memref<128x256xbf16, #tpu.memory_space<vmem>>, %arg7: memref<128x1xf32, #tpu.memory_space<vmem>>, %arg8: memref<32x128xbf16, #tpu.memory_space<vmem>>, %arg9: memref<32x1xf32, #tpu.memory_space<vmem>>, %arg10: memref<1x1x16xf32, #tpu.memory_space<vmem>>) attributes {dimension_semantics = [#tpu.dimension_semantics<parallel>], iteration_bounds = array<i64: 1>, scalar_prefetch = 0 : i64, scratch_operands = 0 : i64, tpu.core_type = #tpu.core_type<tc>, window_params = [{transform_indices = @transform_0, window_bounds = array<i64: 16, 16>}, {transform_indices = @transform_1, window_bounds = array<i64: 16, 16>}, {pipeline_mode = #tpu.pipeline_mode<synchronous>, transform_indices = @transform_2, window_bounds = array<i64: 16, 16>}, {pipeline_mode = #tpu.pipeline_mode<synchronous>, transform_indices = @transform_3, window_bounds = array<i64: 256, 16>}, {pipeline_mode = #tpu.pipeline_mode<synchronous>, transform_indices = @transform_4, window_bounds = array<i64: 256, 1>}, {pipeline_mode = #tpu.pipeline_mode<synchronous>, transform_indices = @transform_5, window_bounds = array<i64: 128, 256>}, {pipeline_mode = #tpu.pipeline_mode<synchronous>, transform_indices = @transform_6, window_bounds = array<i64: 128, 1>}, {pipeline_mode = #tpu.pipeline_mode<synchronous>, transform_indices = @transform_7, window_bounds = array<i64: 32, 128>}, {pipeline_mode = #tpu.pipeline_mode<synchronous>, transform_indices = @transform_8, window_bounds = array<i64: 32, 1>}, {transform_indices = @transform_9, window_bounds = array<i64: 1, 1, 16>}]} {
    %c0 = arith.constant 0 : index
    %c0_0 = arith.constant 0 : index
    %0 = vector.load %arg1[%c0, %c0_0] : memref<16x16xf32, #tpu.memory_space<vmem>>, vector<16x16xf32>
    %1 = arith.truncf %0 : vector<16x16xf32> to vector<16x16xbf16>
    %c0_1 = arith.constant 0 : index
    %c0_2 = arith.constant 0 : index
    %2 = vector.load %arg4[%c0_1, %c0_2] : memref<256x16xbf16, #tpu.memory_space<vmem>>, vector<256x16xbf16>
    %cst = arith.constant dense<0.000000e+00> : vector<256x16xf32>
    %3 = tpu.matmul %2, %1, %cst {dimension_numbers = #tpu.dot_dimension_numbers<[1], [1], [0], [0], [0, 0, 1, 0], [], []>} : vector<256x16xbf16>, vector<16x16xbf16>, vector<256x16xf32> -> vector<256x16xf32>
    %c0_3 = arith.constant 0 : index
    %c0_4 = arith.constant 0 : index
    %4 = vector.load %arg5[%c0_3, %c0_4] : memref<256x1xf32, #tpu.memory_space<vmem>>, vector<256x1xf32>
    %5 = vector.broadcast %4 : vector<256x1xf32> to vector<256x16xf32>
    %6 = arith.addf %3, %5 : vector<256x16xf32>
    %7 = math.tanh %6 : vector<256x16xf32>
    %c0_5 = arith.constant 0 : index
    %c0_6 = arith.constant 0 : index
    %8 = vector.load %arg6[%c0_5, %c0_6] : memref<128x256xbf16, #tpu.memory_space<vmem>>, vector<128x256xbf16>
    %9 = arith.truncf %7 : vector<256x16xf32> to vector<256x16xbf16>
    %cst_7 = arith.constant dense<0.000000e+00> : vector<128x16xf32>
    %10 = tpu.matmul %8, %9, %cst_7 {dimension_numbers = #tpu.dot_dimension_numbers<[1], [0], [0], [1], [0, 0, 1, 1], [], []>} : vector<128x256xbf16>, vector<256x16xbf16>, vector<128x16xf32> -> vector<128x16xf32>
    %c0_8 = arith.constant 0 : index
    %c0_9 = arith.constant 0 : index
    %11 = vector.load %arg7[%c0_8, %c0_9] : memref<128x1xf32, #tpu.memory_space<vmem>>, vector<128x1xf32>
    %12 = vector.broadcast %11 : vector<128x1xf32> to vector<128x16xf32>
    %13 = arith.addf %10, %12 : vector<128x16xf32>
    %14 = math.tanh %13 : vector<128x16xf32>
    %c0_10 = arith.constant 0 : index
    %c0_11 = arith.constant 0 : index
    %15 = vector.load %arg8[%c0_10, %c0_11] : memref<32x128xbf16, #tpu.memory_space<vmem>>, vector<32x128xbf16>
    %16 = arith.truncf %14 : vector<128x16xf32> to vector<128x16xbf16>
    %cst_12 = arith.constant dense<0.000000e+00> : vector<32x16xf32>
    %17 = tpu.matmul %15, %16, %cst_12 {dimension_numbers = #tpu.dot_dimension_numbers<[1], [0], [0], [1], [0, 0, 1, 1], [], []>} : vector<32x128xbf16>, vector<128x16xbf16>, vector<32x16xf32> -> vector<32x16xf32>
    %c0_13 = arith.constant 0 : index
    %c0_14 = arith.constant 0 : index
    %18 = vector.load %arg9[%c0_13, %c0_14] : memref<32x1xf32, #tpu.memory_space<vmem>>, vector<32x1xf32>
    %19 = vector.broadcast %18 : vector<32x1xf32> to vector<32x16xf32>
    %20 = arith.addf %17, %19 : vector<32x16xf32>
    %21 = vector.extract_strided_slice %20 {offsets = [0, 0], sizes = [16, 16], strides = [1, 1]} : vector<32x16xf32> to vector<16x16xf32>
    %22 = vector.extract_strided_slice %20 {offsets = [16, 0], sizes = [16, 16], strides = [1, 1]} : vector<32x16xf32> to vector<16x16xf32>
    %cst_15 = arith.constant 0.000000e+00 : f32
    %23 = vector.broadcast %cst_15 : f32 to vector<16x16xf32>
    %24 = arith.maximumf %22, %23 : vector<16x16xf32>
    %25 = math.absf %22 : vector<16x16xf32>
    %cst_16 = arith.constant 0.000000e+00 : f32
    %26 = vector.broadcast %cst_16 : f32 to vector<16x16xf32>
    %27 = arith.subf %26, %25 : vector<16x16xf32>
    %28 = math.exp %27 : vector<16x16xf32>
    %29 = math.log1p %28 : vector<16x16xf32>
    %30 = arith.addf %24, %29 : vector<16x16xf32>
    %cst_17 = arith.constant 1.000000e+01 : f32
    %31 = vector.broadcast %cst_17 : f32 to vector<16x16xf32>
    %32 = arith.mulf %31, %30 : vector<16x16xf32>
    %33 = arith.mulf %32, %32 : vector<16x16xf32>
    %34 = tpu.reciprocal %33 {approx = true} : vector<16x16xf32> -> vector<16x16xf32>
    %cst_18 = arith.constant 5.000000e-01 : f32
    %35 = vector.broadcast %cst_18 : f32 to vector<16x16xf32>
    %36 = arith.mulf %35, %34 : vector<16x16xf32>
    %c0_19 = arith.constant 0 : index
    %c0_20 = arith.constant 0 : index
    %37 = vector.load %arg3[%c0_19, %c0_20] : memref<16x16xf32, #tpu.memory_space<vmem>>, vector<16x16xf32>
    %c0_21 = arith.constant 0 : index
    %c0_22 = arith.constant 0 : index
    %38 = vector.load %arg2[%c0_21, %c0_22] : memref<16x16xf32, #tpu.memory_space<vmem>>, vector<16x16xf32>
    %cst_23 = arith.constant dense<0.000000e+00> : vector<16x16xf32>
    %39 = tpu.matmul %37, %38, %cst_23 {dimension_numbers = #tpu.dot_dimension_numbers<[1], [1], [0], [0], [0, 0, 1, 0], [], []>, precision = #tpu.contract_precision<fp32>} : vector<16x16xf32>, vector<16x16xf32>, vector<16x16xf32> -> vector<16x16xf32>
    %40 = arith.subf %39, %21 : vector<16x16xf32>
    %41 = arith.mulf %40, %40 : vector<16x16xf32>
    %42 = arith.mulf %41, %36 : vector<16x16xf32>
    %43 = math.log %32 : vector<16x16xf32>
    %44 = arith.addf %42, %43 : vector<16x16xf32>
    %cst_24 = arith.constant dense<0.000000e+00> : vector<16xf32>
    %45 = vector.multi_reduction <add>, %44, %cst_24 [0] : vector<16x16xf32> to vector<16xf32>
    %46 = vector.shape_cast %45 : vector<16xf32> to vector<1x16xf32>
    %cst_25 = arith.constant 6.250000e-02 : f32
    %47 = vector.broadcast %cst_25 : f32 to vector<1x16xf32>
    %48 = arith.mulf %46, %47 : vector<1x16xf32>
    %49 = vector.shape_cast %48 : vector<1x16xf32> to vector<1x1x16xf32>
    %c0_26 = arith.constant 0 : index
    %c0_27 = arith.constant 0 : index
    %c0_28 = arith.constant 0 : index
    %50 = vector.load %arg10[%c0_26, %c0_27, %c0_28] : memref<1x1x16xf32, #tpu.memory_space<vmem>>, vector<1x1x16xf32>
    tpu.vector_store %arg10[%c0_26, %c0_27, %c0_28], %49 {strides = array<i32>} : memref<1x1x16xf32, #tpu.memory_space<vmem>>, vector<1x1x16xf32>,
    return
  }
  func.func @transform_0(%arg0: i32) -> (i32, i32) {
    %c0_i32 = arith.constant 0 : i32
    %c0_i32_0 = arith.constant 0 : i32
    return %arg0, %c0_i32 : i32, i32
  }
  func.func @transform_1(%arg0: i32) -> (i32, i32) {
    %c0_i32 = arith.constant 0 : i32
    %c0_i32_0 = arith.constant 0 : i32
    return %arg0, %c0_i32 : i32, i32
  }
  func.func @transform_2(%arg0: i32) -> (i32, i32) {
    %c0_i32 = arith.constant 0 : i32
    %c0_i32_0 = arith.constant 0 : i32
    %c0_i32_1 = arith.constant 0 : i32
    return %c0_i32, %c0_i32_0 : i32, i32
  }
  func.func @transform_3(%arg0: i32) -> (i32, i32) {
    %c0_i32 = arith.constant 0 : i32
    %c0_i32_0 = arith.constant 0 : i32
    %c0_i32_1 = arith.constant 0 : i32
    return %c0_i32, %c0_i32_0 : i32, i32
  }
  func.func @transform_4(%arg0: i32) -> (i32, i32) {
    %c0_i32 = arith.constant 0 : i32
    %c0_i32_0 = arith.constant 0 : i32
    %c0_i32_1 = arith.constant 0 : i32
    return %c0_i32, %c0_i32_0 : i32, i32
  }
  func.func @transform_5(%arg0: i32) -> (i32, i32) {
    %c0_i32 = arith.constant 0 : i32
    %c0_i32_0 = arith.constant 0 : i32
    %c0_i32_1 = arith.constant 0 : i32
    return %c0_i32, %c0_i32_0 : i32, i32
  }
  func.func @transform_6(%arg0: i32) -> (i32, i32) {
    %c0_i32 = arith.constant 0 : i32
    %c0_i32_0 = arith.constant 0 : i32
    %c0_i32_1 = arith.constant 0 : i32
    return %c0_i32, %c0_i32_0 : i32, i32
  }
  func.func @transform_7(%arg0: i32) -> (i32, i32) {
    %c0_i32 = arith.constant 0 : i32
    %c0_i32_0 = arith.constant 0 : i32
    %c0_i32_1 = arith.constant 0 : i32
    return %c0_i32, %c0_i32_0 : i32, i32
  }
  func.func @transform_8(%arg0: i32) -> (i32, i32) {
    %c0_i32 = arith.constant 0 : i32
    %c0_i32_0 = arith.constant 0 : i32
    %c0_i32_1 = arith.constant 0 : i32
    return %c0_i32, %c0_i32_0 : i32, i32
  }
  func.func @transform_9(%arg0: i32) -> (i32, i32, i32) {
    %c0_i32 = arith.constant 0 : i32
    %c0_i32_0 = arith.constant 0 : i32
    %c0_i32_1 = arith.constant 0 : i32
    return %arg0, %c0_i32, %c0_i32_0 : i32, i32, i32
  }
}

</mosaic_0001>

<llo_original>
// kernel: _forward_impl.1
$region0: #{_forward_impl.1}
  #allocation0 [shape = 'u32[]', space=smem, size = 0x4, offset = 0x4, fixed_abs, tag = 'smem constant byte address 0x4 - core index']
  #allocation1 [shape = 'u32[144,128]{1,0:T(1,128)}', space=vmem, size = 0x12000, scoped, tag = 'internal scratch']
  %s0 = inlined_call_operand.vmem [shape: f32[16,16], index: 0, kind: input, shape index: {}]
  %s1 = inlined_call_operand.vmem [shape: f32[16,16], index: 1, kind: input, shape index: {}]
  %s2 = inlined_call_operand.vmem [shape: f32[16,16], index: 2, kind: input, shape index: {}]
  %s3 = inlined_call_operand.vmem [shape: bf16[256,16], index: 3, kind: input, shape index: {}]
  %s4 = inlined_call_operand.vmem [shape: f32[256,1], index: 4, kind: input, shape index: {}]
  %s5 = inlined_call_operand.vmem [shape: bf16[128,256], index: 5, kind: input, shape index: {}]
  %s6 = inlined_call_operand.vmem [shape: f32[128,1], index: 6, kind: input, shape index: {}]
  %s7 = inlined_call_operand.vmem [shape: bf16[32,128], index: 7, kind: input, shape index: {}]
  %s8 = inlined_call_operand.vmem [shape: f32[32,1], index: 8, kind: input, shape index: {}]
  %s9 = inlined_call_operand.vmem [shape: f32[1,1,16], index: 9, kind: output, shape index: {}]
  %s10 = sld [smem:[#allocation0]]
  $region46: #{_forward_impl.1} parent=0
    _
  %s12 = ssub.s32 1, %s10
  %s13 = scalar_select 0, %s12, %s10
  // Predicated region
  $region2: #{_forward_impl.1} parent=0 // pred_check
    _
  $region3: #{_forward_impl.1} parent=0 // pred_check_branch
    %15 = sbr.rel (0) target = $region5
  $region4: #{_forward_impl.1} parent=0 // pred_region
    _
  $region5: #{_forward_impl.1} parent=0 // pred_fallthru
    _
  // Predicated region
  $region6: #{_forward_impl.1} parent=0 // pred_check
    _
  $region7: #{_forward_impl.1} parent=0 // pred_check_branch
    %17 = sbr.rel (0) target = $region9
  $region8: #{_forward_impl.1} parent=0 // pred_region
    _
  $region9: #{_forward_impl.1} parent=0 // pred_fallthru
    _
  // Predicated region
  $region10: #{_forward_impl.1} parent=0 // pred_check
    _
  $region11: #{_forward_impl.1} parent=0 // pred_check_branch
    %19 = sbr.rel (0) target = $region13
  $region12: #{_forward_impl.1} parent=0 // pred_region
    _
  $region13: #{_forward_impl.1} parent=0 // pred_fallthru
    _
  // Predicated region
  $region14: #{_forward_impl.1} parent=0 // pred_check
    _
  $region15: #{_forward_impl.1} parent=0 // pred_check_branch
    %21 = sbr.rel (0) target = $region17
  $region16: #{_forward_impl.1} parent=0 // pred_region
    _
  $region17: #{_forward_impl.1} parent=0 // pred_fallthru
    _
  // Predicated region
  $region18: #{_forward_impl.1} parent=0 // pred_check
    _
  $region19: #{_forward_impl.1} parent=0 // pred_check_branch
    %23 = sbr.rel (0) target = $region21
  $region20: #{_forward_impl.1} parent=0 // pred_region
    _
  $region21: #{_forward_impl.1} parent=0 // pred_fallthru
    _
  // Predicated region
  $region22: #{_forward_impl.1} parent=0 // pred_check
    _
  $region23: #{_forward_impl.1} parent=0 // pred_check_branch
    %25 = sbr.rel (0) target = $region25
  $region24: #{_forward_impl.1} parent=0 // pred_region
    _
  $region25: #{_forward_impl.1} parent=0 // pred_fallthru
    _
  // Predicated region
  $region26: #{_forward_impl.1} parent=0 // pred_check
    _
  $region27: #{_forward_impl.1} parent=0 // pred_check_branch
    %27 = sbr.rel (0) target = $region29
  $region28: #{_forward_impl.1} parent=0 // pred_region
    _
  $region29: #{_forward_impl.1} parent=0 // pred_fallthru
    _
  // Predicated region
  $region30: #{_forward_impl.1} parent=0 // pred_check
    _
  $region31: #{_forward_impl.1} parent=0 // pred_check_branch
    %29 = sbr.rel (0) target = $region33
  $region32: #{_forward_impl.1} parent=0 // pred_region
    _
  $region33: #{_forward_impl.1} parent=0 // pred_fallthru
    _
  // Predicated region
  $region34: #{_forward_impl.1} parent=0 // pred_check
    _
  $region35: #{_forward_impl.1} parent=0 // pred_check_branch
    %31 = sbr.rel (0) target = $region37
  $region36: #{_forward_impl.1} parent=0 // pred_region
    _
  $region37: #{_forward_impl.1} parent=0 // pred_fallthru
    _
  %v33 = vld [vmem:[%s0] sm:$0xff]
  %v34 = vld [vmem:[%s0 + $0x8] sm:$0xff]
  %v35 = vpack.c.bf16 %v34, %v33
  %v36 = vld [vmem:[%s3] sm:$0xf]
  %v37 = vld [vmem:[%s3 + $0x4] sm:$0xf]
  %v38 = vld [vmem:[%s3 + $0x8] sm:$0xf]
  %v39 = vld [vmem:[%s3 + $0xc] sm:$0xf]
  %v40 = vld [vmem:[%s3 + $0x10] sm:$0xf]
  %v41 = vld [vmem:[%s3 + $0x14] sm:$0xf]
  %v42 = vld [vmem:[%s3 + $0x18] sm:$0xf]
  %v43 = vld [vmem:[%s3 + $0x1c] sm:$0xf]
  %v44 = vld [vmem:[%s3 + $0x20] sm:$0xf]
  %v45 = vld [vmem:[%s3 + $0x24] sm:$0xf]
  %v46 = vld [vmem:[%s3 + $0x28] sm:$0xf]
  %v47 = vld [vmem:[%s3 + $0x2c] sm:$0xf]
  %v48 = vld [vmem:[%s3 + $0x30] sm:$0xf]
  %v49 = vld [vmem:[%s3 + $0x34] sm:$0xf]
  %v50 = vld [vmem:[%s3 + $0x38] sm:$0xf]
  %v51 = vld [vmem:[%s3 + $0x3c] sm:$0xf]
  %v52 = vld [vmem:[%s3 + $0x40] sm:$0xf]
  %v53 = vld [vmem:[%s3 + $0x44] sm:$0xf]
  %v54 = vld [vmem:[%s3 + $0x48] sm:$0xf]
  %v55 = vld [vmem:[%s3 + $0x4c] sm:$0xf]
  %v56 = vld [vmem:[%s3 + $0x50] sm:$0xf]
  %v57 = vld [vmem:[%s3 + $0x54] sm:$0xf]
  %v58 = vld [vmem:[%s3 + $0x58] sm:$0xf]
  %v59 = vld [vmem:[%s3 + $0x5c] sm:$0xf]
  %v60 = vld [vmem:[%s3 + $0x60] sm:$0xf]
  %v61 = vld [vmem:[%s3 + $0x64] sm:$0xf]
  %v62 = vld [vmem:[%s3 + $0x68] sm:$0xf]
  %v63 = vld [vmem:[%s3 + $0x6c] sm:$0xf]
  %v64 = vld [vmem:[%s3 + $0x70] sm:$0xf]
  %v65 = vld [vmem:[%s3 + $0x74] sm:$0xf]
  %v66 = vld [vmem:[%s3 + $0x78] sm:$0xf]
  %v67 = vld [vmem:[%s3 + $0x7c] sm:$0xf]
  %v68 = vld [vmem:[%s4] sm:$0xff]
  %v69 = vld [vmem:[%s4 + $0x8] sm:$0xff]
  %v70 = vld [vmem:[%s4 + $0x10] sm:$0xff]
  %v71 = vld [vmem:[%s4 + $0x18] sm:$0xff]
  %v72 = vld [vmem:[%s4 + $0x20] sm:$0xff]
  %v73 = vld [vmem:[%s4 + $0x28] sm:$0xff]
  %v74 = vld [vmem:[%s4 + $0x30] sm:$0xff]
  %v75 = vld [vmem:[%s4 + $0x38] sm:$0xff]
  %v76 = vld [vmem:[%s4 + $0x40] sm:$0xff]
  %v77 = vld [vmem:[%s4 + $0x48] sm:$0xff]
  %v78 = vld [vmem:[%s4 + $0x50] sm:$0xff]
  %v79 = vld [vmem:[%s4 + $0x58] sm:$0xff]
  %v80 = vld [vmem:[%s4 + $0x60] sm:$0xff]
  %v81 = vld [vmem:[%s4 + $0x68] sm:$0xff]
  %v82 = vld [vmem:[%s4 + $0x70] sm:$0xff]
  %v83 = vld [vmem:[%s4 + $0x78] sm:$0xff]
  %v84 = vld [vmem:[%s4 + $0x80] sm:$0xff]
  %v85 = vld [vmem:[%s4 + $0x88] sm:$0xff]
  %v86 = vld [vmem:[%s4 + $0x90] sm:$0xff]
  %v87 = vld [vmem:[%s4 + $0x98] sm:$0xff]
  %v88 = vld [vmem:[%s4 + $0xa0] sm:$0xff]
  %v89 = vld [vmem:[%s4 + $0xa8] sm:$0xff]
  %v90 = vld [vmem:[%s4 + $0xb0] sm:$0xff]
  %v91 = vld [vmem:[%s4 + $0xb8] sm:$0xff]
  %v92 = vld [vmem:[%s4 + $0xc0] sm:$0xff]
  %v93 = vld [vmem:[%s4 + $0xc8] sm:$0xff]
  %v94 = vld [vmem:[%s4 + $0xd0] sm:$0xff]
  %v95 = vld [vmem:[%s4 + $0xd8] sm:$0xff]
  %v96 = vld [vmem:[%s4 + $0xe0] sm:$0xff]
  %v97 = vld [vmem:[%s4 + $0xe8] sm:$0xff]
  %v98 = vld [vmem:[%s4 + $0xf0] sm:$0xff]
  %v99 = vld [vmem:[%s4 + $0xf8] sm:$0xff]
  %101 = vset.pattern.permute.xlu0 0
  %102 = vperm.xlu0 %101, %v68
  %v103 = vpop.permute.xlu0 %102
  %106 = vset.pattern.permute.xlu0 0
  %107 = vperm.xlu0 %106, %v69
  %v108 = vpop.permute.xlu0 %107
  %111 = vset.pattern.permute.xlu0 0
  %112 = vperm.xlu0 %111, %v70
  %v113 = vpop.permute.xlu0 %112
  %116 = vset.pattern.permute.xlu0 0
  %117 = vperm.xlu0 %116, %v71
  %v118 = vpop.permute.xlu0 %117
  %121 = vset.pattern.permute.xlu0 0
  %122 = vperm.xlu0 %121, %v72
  %v123 = vpop.permute.xlu0 %122
  %126 = vset.pattern.permute.xlu0 0
  %127 = vperm.xlu0 %126, %v73
  %v128 = vpop.permute.xlu0 %127
  %131 = vset.pattern.permute.xlu0 0
  %132 = vperm.xlu0 %131, %v74
  %v133 = vpop.permute.xlu0 %132
  %136 = vset.pattern.permute.xlu0 0
  %137 = vperm.xlu0 %136, %v75
  %v138 = vpop.permute.xlu0 %137
  %141 = vset.pattern.permute.xlu0 0
  %142 = vperm.xlu0 %141, %v76
  %v143 = vpop.permute.xlu0 %142
  %146 = vset.pattern.permute.xlu0 0
  %147 = vperm.xlu0 %146, %v77
  %v148 = vpop.permute.xlu0 %147
  %151 = vset.pattern.permute.xlu0 0
  %152 = vperm.xlu0 %151, %v78
  %v153 = vpop.permute.xlu0 %152
  %156 = vset.pattern.permute.xlu0 0
  %157 = vperm.xlu0 %156, %v79
  %v158 = vpop.permute.xlu0 %157
  %161 = vset.pattern.permute.xlu0 0
  %162 = vperm.xlu0 %161, %v80
  %v163 = vpop.permute.xlu0 %162
  %166 = vset.pattern.permute.xlu0 0
  %167 = vperm.xlu0 %166, %v81
  %v168 = vpop.permute.xlu0 %167
  %171 = vset.pattern.permute.xlu0 0
  %172 = vperm.xlu0 %171, %v82
  %v173 = vpop.permute.xlu0 %172
  %176 = vset.pattern.permute.xlu0 0
  %177 = vperm.xlu0 %176, %v83
  %v178 = vpop.permute.xlu0 %177
  %181 = vset.pattern.permute.xlu0 0
  %182 = vperm.xlu0 %181, %v84
  %v183 = vpop.permute.xlu0 %182
  %186 = vset.pattern.permute.xlu0 0
  %187 = vperm.xlu0 %186, %v85
  %v188 = vpop.permute.xlu0 %187
  %191 = vset.pattern.permute.xlu0 0
  %192 = vperm.xlu0 %191, %v86
  %v193 = vpop.permute.xlu0 %192
  %196 = vset.pattern.permute.xlu0 0
  %197 = vperm.xlu0 %196, %v87
  %v198 = vpop.permute.xlu0 %197
  %201 = vset.pattern.permute.xlu0 0
  %202 = vperm.xlu0 %201, %v88
  %v203 = vpop.permute.xlu0 %202
  %206 = vset.pattern.permute.xlu0 0
  %207 = vperm.xlu0 %206, %v89
  %v208 = vpop.permute.xlu0 %207
  %211 = vset.pattern.permute.xlu0 0
  %212 = vperm.xlu0 %211, %v90
  %v213 = vpop.permute.xlu0 %212
  %216 = vset.pattern.permute.xlu0 0
  %217 = vperm.xlu0 %216, %v91
  %v218 = vpop.permute.xlu0 %217
  %221 = vset.pattern.permute.xlu0 0
  %222 = vperm.xlu0 %221, %v92
  %v223 = vpop.permute.xlu0 %222
  %226 = vset.pattern.permute.xlu0 0
  %227 = vperm.xlu0 %226, %v93
  %v228 = vpop.permute.xlu0 %227
  %231 = vset.pattern.permute.xlu0 0
  %232 = vperm.xlu0 %231, %v94
  %v233 = vpop.permute.xlu0 %232
  %236 = vset.pattern.permute.xlu0 0
  %237 = vperm.xlu0 %236, %v95
  %v238 = vpop.permute.xlu0 %237
  %241 = vset.pattern.permute.xlu0 0
  %242 = vperm.xlu0 %241, %v96
  %v243 = vpop.permute.xlu0 %242
  %246 = vset.pattern.permute.xlu0 0
  %247 = vperm.xlu0 %246, %v97
  %v248 = vpop.permute.xlu0 %247
  %251 = vset.pattern.permute.xlu0 0
  %252 = vperm.xlu0 %251, %v98
  %v253 = vpop.permute.xlu0 %252
  %256 = vset.pattern.permute.xlu0 0
  %257 = vperm.xlu0 %256, %v99
  %v258 = vpop.permute.xlu0 %257
  %v292 = vunpack.c.l.b16 %v36
  %v293 = vunpack.c.l.b16 %v37
  %v294 = vunpack.c.l.b16 %v38
  %v295 = vunpack.c.l.b16 %v39
  %v296 = vunpack.c.l.b16 %v40
  %v297 = vunpack.c.l.b16 %v41
  %v298 = vunpack.c.l.b16 %v42
  %v299 = vunpack.c.l.b16 %v43
  %v300 = vunpack.c.l.b16 %v44
  %v301 = vunpack.c.l.b16 %v45
  %v302 = vunpack.c.l.b16 %v46
  %v303 = vunpack.c.l.b16 %v47
  %v304 = vunpack.c.l.b16 %v48
  %v305 = vunpack.c.l.b16 %v49
  %v306 = vunpack.c.l.b16 %v50
  %v307 = vunpack.c.l.b16 %v51
  %v308 = vunpack.c.l.b16 %v52
  %v309 = vunpack.c.l.b16 %v53
  %v310 = vunpack.c.l.b16 %v54
  %v311 = vunpack.c.l.b16 %v55
  %v312 = vunpack.c.l.b16 %v56
  %v313 = vunpack.c.l.b16 %v57
  %v314 = vunpack.c.l.b16 %v58
  %v315 = vunpack.c.l.b16 %v59
  %v316 = vunpack.c.l.b16 %v60
  %v317 = vunpack.c.l.b16 %v61
  %v318 = vunpack.c.l.b16 %v62
  %v319 = vunpack.c.l.b16 %v63
  %v320 = vunpack.c.l.b16 %v64
  %v321 = vunpack.c.l.b16 %v65
  %v322 = vunpack.c.l.b16 %v66
  %v323 = vunpack.c.l.b16 %v67
  %v324 = vpack.c.b16 %v293, %v292
  %v325 = vpack.c.b16 %v295, %v294
  %v326 = vpack.c.b16 %v297, %v296
  %v327 = vpack.c.b16 %v299, %v298
  %v328 = vpack.c.b16 %v301, %v300
  %v329 = vpack.c.b16 %v303, %v302
  %v330 = vpack.c.b16 %v305, %v304
  %v331 = vpack.c.b16 %v307, %v306
  %v332 = vpack.c.b16 %v309, %v308
  %v333 = vpack.c.b16 %v311, %v310
  %v334 = vpack.c.b16 %v313, %v312
  %v335 = vpack.c.b16 %v315, %v314
  %v336 = vpack.c.b16 %v317, %v316
  %v337 = vpack.c.b16 %v319, %v318
  %v338 = vpack.c.b16 %v321, %v320
  %v339 = vpack.c.b16 %v323, %v322
  %vm340 = vcmask 130048
  %v342 = vsel %vm340, %v324, 0
  %v345 = vsel %vm340, %v325, 0
  %v348 = vsel %vm340, %v326, 0
  %v351 = vsel %vm340, %v327, 0
  %v354 = vsel %vm340, %v328, 0
  %v357 = vsel %vm340, %v329, 0
  %v360 = vsel %vm340, %v330, 0
  %v363 = vsel %vm340, %v331, 0
  %v366 = vsel %vm340, %v332, 0
  %v369 = vsel %vm340, %v333, 0
  %v372 = vsel %vm340, %v334, 0
  %v375 = vsel %vm340, %v335, 0
  %v378 = vsel %vm340, %v336, 0
  %v381 = vsel %vm340, %v337, 0
  %v384 = vsel %vm340, %v338, 0
  %v387 = vsel %vm340, %v339, 0
  %v390 = vsel %vm340, %v35, 0
  %392 = vmatprep.subr.bf16.mxu0 0
  %393 = vmatpush1.bf16.xpose.msra.mxu0 %v390
  %394 = vmatprep.subr.bf16.mxu0 0
  %395 = vmatpush1.bf16.xpose.msra.mxu0 0
  %396 = vmatprep.subr.bf16.mxu0 0
  %397 = vmatpush1.bf16.xpose.msra.mxu0 0
  %398 = vmatprep.subr.bf16.mxu0 0
  %399 = vmatpush1.bf16.xpose.msra.mxu0 0
  %400 = vmatprep.subr.bf16.mxu0 0
  %401 = vmatpush1.bf16.xpose.msra.mxu0 0
  %402 = vmatprep.subr.bf16.mxu0 0
  %403 = vmatpush1.bf16.xpose.msra.mxu0 0
  %404 = vmatprep.subr.bf16.mxu0 0
  %405 = vmatpush1.bf16.xpose.msra.mxu0 0
  %406 = vmatprep.subr.bf16.mxu0 0
  %407 = vmatpush1.bf16.xpose.msra.mxu0 0
  %408 = vmatprep.subr.bf16.mxu0 0
  %409 = vmatpush1.bf16.xpose.msra.mxu0 0
  %410 = vmatprep.subr.bf16.mxu0 0
  %411 = vmatpush1.bf16.xpose.msra.mxu0 0
  %412 = vmatprep.subr.bf16.mxu0 0
  %413 = vmatpush1.bf16.xpose.msra.mxu0 0
  %414 = vmatprep.subr.bf16.mxu0 0
  %415 = vmatpush1.bf16.xpose.msra.mxu0 0
  %416 = vmatprep.subr.bf16.mxu0 0
  %417 = vmatpush1.bf16.xpose.msra.mxu0 0
  %418 = vmatprep.subr.bf16.mxu0 0
  %419 = vmatpush1.bf16.xpose.msra.mxu0 0
  %420 = vmatprep.subr.bf16.mxu0 0
  %421 = vmatpush1.bf16.xpose.msra.mxu0 0
  %422 = vmatprep.subr.bf16.mxu0 0
  %423 = vmatpush1.bf16.xpose.msra.mxu0 0
  %424 = vmatprep.mubr.bf16.mxu0 0
  %425 = vmatmul.mubr.bf16.gmra.mrb[0].mxu0 %v342
  %v426 = vpop.f32.mrb[0].mxu0
  %v427 = vadd.f32 %v103, %v426
  %v428 = vpop.f32.mrb[0].mxu0
  %v429 = vpop.f32.mrb[0].mxu0
  %v430 = vadd.f32 %v108, %v429
  %v431 = vpop.f32.mrb[0].mxu0
  %432 = vmatprep.mubr.bf16.mxu0 0
  %433 = vmatmul.mubr.bf16.gmra.mrb[0].mxu0 %v345
  %v434 = vpop.f32.mrb[0].mxu0
  %v435 = vadd.f32 %v113, %v434
  %v436 = vpop.f32.mrb[0].mxu0
  %v437 = vpop.f32.mrb[0].mxu0
  %v438 = vadd.f32 %v118, %v437
  %v439 = vpop.f32.mrb[0].mxu0
  %440 = vmatprep.mubr.bf16.mxu0 0
  %441 = vmatmul.mubr.bf16.gmra.mrb[0].mxu0 %v348
  %v442 = vpop.f32.mrb[0].mxu0
  %v443 = vadd.f32 %v123, %v442
  %v444 = vpop.f32.mrb[0].mxu0
  %v445 = vpop.f32.mrb[0].mxu0
  %v446 = vadd.f32 %v128, %v445
  %v447 = vpop.f32.mrb[0].mxu0
  %448 = vmatprep.mubr.bf16.mxu0 0
  %449 = vmatmul.mubr.bf16.gmra.mrb[0].mxu0 %v351
  %v450 = vpop.f32.mrb[0].mxu0
  %v451 = vadd.f32 %v133, %v450
  %v452 = vpop.f32.mrb[0].mxu0
  %v453 = vpop.f32.mrb[0].mxu0
  %v454 = vadd.f32 %v138, %v453
  %v455 = vpop.f32.mrb[0].mxu0
  %456 = vmatprep.mubr.bf16.mxu0 0
  %457 = vmatmul.mubr.bf16.gmra.mrb[0].mxu0 %v354
  %v458 = vpop.f32.mrb[0].mxu0
  %v459 = vadd.f32 %v143, %v458
  %v460 = vpop.f32.mrb[0].mxu0
  %v461 = vpop.f32.mrb[0].mxu0
  %v462 = vadd.f32 %v148, %v461
  %v463 = vpop.f32.mrb[0].mxu0
  %464 = vmatprep.mubr.bf16.mxu0 0
  %465 = vmatmul.mubr.bf16.gmra.mrb[0].mxu0 %v357
  %v466 = vpop.f32.mrb[0].mxu0
  %v467 = vadd.f32 %v153, %v466
  %v468 = vpop.f32.mrb[0].mxu0
  %v469 = vpop.f32.mrb[0].mxu0
  %v470 = vadd.f32 %v158, %v469
  %v471 = vpop.f32.mrb[0].mxu0
  %472 = vmatprep.mubr.bf16.mxu0 0
  %473 = vmatmul.mubr.bf16.gmra.mrb[0].mxu0 %v360
  %v474 = vpop.f32.mrb[0].mxu0
  %v475 = vadd.f32 %v163, %v474
  %v476 = vpop.f32.mrb[0].mxu0
  %v477 = vpop.f32.mrb[0].mxu0
  %v478 = vadd.f32 %v168, %v477
  %v479 = vpop.f32.mrb[0].mxu0
  %480 = vmatprep.mubr.bf16.mxu0 0
  %481 = vmatmul.mubr.bf16.gmra.mrb[0].mxu0 %v363
  %v482 = vpop.f32.mrb[0].mxu0
  %v483 = vadd.f32 %v173, %v482
  %v484 = vpop.f32.mrb[0].mxu0
  %v485 = vpop.f32.mrb[0].mxu0
  %v486 = vadd.f32 %v178, %v485
  %v487 = vpop.f32.mrb[0].mxu0
  %488 = vmatprep.mubr.bf16.mxu0 0
  %489 = vmatmul.mubr.bf16.gmra.mrb[0].mxu0 %v366
  %v490 = vpop.f32.mrb[0].mxu0
  %v491 = vadd.f32 %v183, %v490
  %v492 = vpop.f32.mrb[0].mxu0
  %v493 = vpop.f32.mrb[0].mxu0
  %v494 = vadd.f32 %v188, %v493
  %v495 = vpop.f32.mrb[0].mxu0
  %496 = vmatprep.mubr.bf16.mxu0 0
  %497 = vmatmul.mubr.bf16.gmra.mrb[0].mxu0 %v369
  %v498 = vpop.f32.mrb[0].mxu0
  %v499 = vadd.f32 %v193, %v498
  %v500 = vpop.f32.mrb[0].mxu0
  %v501 = vpop.f32.mrb[0].mxu0
  %v502 = vadd.f32 %v198, %v501
  %v503 = vpop.f32.mrb[0].mxu0
  %504 = vmatprep.mubr.bf16.mxu0 0
  %505 = vmatmul.mubr.bf16.gmra.mrb[0].mxu0 %v372
  %v506 = vpop.f32.mrb[0].mxu0
  %v507 = vadd.f32 %v203, %v506
  %v508 = vpop.f32.mrb[0].mxu0
  %v509 = vpop.f32.mrb[0].mxu0
  %v510 = vadd.f32 %v208, %v509
  %v511 = vpop.f32.mrb[0].mxu0
  %512 = vmatprep.mubr.bf16.mxu0 0
  %513 = vmatmul.mubr.bf16.gmra.mrb[0].mxu0 %v375
  %v514 = vpop.f32.mrb[0].mxu0
  %v515 = vadd.f32 %v213, %v514
  %v516 = vpop.f32.mrb[0].mxu0
  %v517 = vpop.f32.mrb[0].mxu0
  %v518 = vadd.f32 %v218, %v517
  %v519 = vpop.f32.mrb[0].mxu0
  %520 = vmatprep.mubr.bf16.mxu0 0
  %521 = vmatmul.mubr.bf16.gmra.mrb[0].mxu0 %v378
  %v522 = vpop.f32.mrb[0].mxu0
  %v523 = vadd.f32 %v223, %v522
  %v524 = vpop.f32.mrb[0].mxu0
  %v525 = vpop.f32.mrb[0].mxu0
  %v526 = vadd.f32 %v228, %v525
  %v527 = vpop.f32.mrb[0].mxu0
  %528 = vmatprep.mubr.bf16.mxu0 0
  %529 = vmatmul.mubr.bf16.gmra.mrb[0].mxu0 %v381
  %v530 = vpop.f32.mrb[0].mxu0
  %v531 = vadd.f32 %v233, %v530
  %v532 = vpop.f32.mrb[0].mxu0
  %v533 = vpop.f32.mrb[0].mxu0
  %v534 = vadd.f32 %v238, %v533
  %v535 = vpop.f32.mrb[0].mxu0
  %536 = vmatprep.mubr.bf16.mxu0 0
  %537 = vmatmul.mubr.bf16.gmra.mrb[0].mxu0 %v384
  %v538 = vpop.f32.mrb[0].mxu0
  %v539 = vadd.f32 %v243, %v538
  %v540 = vpop.f32.mrb[0].mxu0
  %v541 = vpop.f32.mrb[0].mxu0
  %v542 = vadd.f32 %v248, %v541
  %v543 = vpop.f32.mrb[0].mxu0
  %544 = vmatprep.mubr.bf16.mxu0 0
  %545 = vmatmul.mubr.bf16.gmra.mrb[0].mxu0 %v387
  %v546 = vpop.f32.mrb[0].mxu0
  %v547 = vadd.f32 %v253, %v546
  %v548 = vpop.f32.mrb[0].mxu0
  %v549 = vpop.f32.mrb[0].mxu0
  %v550 = vadd.f32 %v258, %v549
  %v551 = vpop.f32.mrb[0].mxu0
  %552 = vdwg.mxu0
  %v553 = vtanh.pop %v427
  %v554 = vtanh.pop %v430
  %v555 = vtanh.pop %v435
  %v556 = vtanh.pop %v438
  %v557 = vtanh.pop %v443
  %v558 = vtanh.pop %v446
  %v559 = vtanh.pop %v451
  %v560 = vtanh.pop %v454
  %v561 = vtanh.pop %v459
  %v562 = vtanh.pop %v462
  %v563 = vtanh.pop %v467
  %v564 = vtanh.pop %v470
  %v565 = vtanh.pop %v475
  %v566 = vtanh.pop %v478
  %v567 = vtanh.pop %v483
  %v568 = vtanh.pop %v486
  %v569 = vtanh.pop %v491
  %v570 = vtanh.pop %v494
  %v571 = vtanh.pop %v499
  %v572 = vtanh.pop %v502
  %v573 = vtanh.pop %v507
  %v574 = vtanh.pop %v510
  %v575 = vtanh.pop %v515
  %v576 = vtanh.pop %v518
  %v577 = vtanh.pop %v523
  %v578 = vtanh.pop %v526
  %v579 = vtanh.pop %v531
  %v580 = vtanh.pop %v534
  %v581 = vtanh.pop %v539
  %v582 = vtanh.pop %v542
  %v583 = vtanh.pop %v547
  %v584 = vtanh.pop %v550
  %v585 = vld [vmem:[%s5] sm:$0xff]
  %v586 = vld [vmem:[%s5 + $0x8] sm:$0xff]
  %v587 = vld [vmem:[%s5 + $0x10] sm:$0xff]
  %v588 = vld [vmem:[%s5 + $0x18] sm:$0xff]
  %v589 = vld [vmem:[%s5 + $0x20] sm:$0xff]
  %v590 = vld [vmem:[%s5 + $0x28] sm:$0xff]
  %v591 = vld [vmem:[%s5 + $0x30] sm:$0xff]
  %v592 = vld [vmem:[%s5 + $0x38] sm:$0xff]
  %v593 = vld [vmem:[%s5 + $0x40] sm:$0xff]
  %v594 = vld [vmem:[%s5 + $0x48] sm:$0xff]
  %v595 = vld [vmem:[%s5 + $0x50] sm:$0xff]
  %v596 = vld [vmem:[%s5 + $0x58] sm:$0xff]
  %v597 = vld [vmem:[%s5 + $0x60] sm:$0xff]
  %v598 = vld [vmem:[%s5 + $0x68] sm:$0xff]
  %v599 = vld [vmem:[%s5 + $0x70] sm:$0xff]
  %v600 = vld [vmem:[%s5 + $0x78] sm:$0xff]
  %v601 = vpack.c.bf16 %v554, %v553
  %v602 = vpack.c.bf16 %v556, %v555
  %v603 = vpack.c.bf16 %v558, %v557
  %v604 = vpack.c.bf16 %v560, %v559
  %v605 = vpack.c.bf16 %v562, %v561
  %v606 = vpack.c.bf16 %v564, %v563
  %v607 = vpack.c.bf16 %v566, %v565
  %v608 = vpack.c.bf16 %v568, %v567
  %v609 = vpack.c.bf16 %v570, %v569
  %v610 = vpack.c.bf16 %v572, %v571
  %v611 = vpack.c.bf16 %v574, %v573
  %v612 = vpack.c.bf16 %v576, %v575
  %v613 = vpack.c.bf16 %v578, %v577
  %v614 = vpack.c.bf16 %v580, %v579
  %v615 = vpack.c.bf16 %v582, %v581
  %v616 = vpack.c.bf16 %v584, %v583
  %v617 = vld [vmem:[%s6] sm:$0xff]
  %v618 = vld [vmem:[%s6 + $0x8] sm:$0xff]
  %v619 = vld [vmem:[%s6 + $0x10] sm:$0xff]
  %v620 = vld [vmem:[%s6 + $0x18] sm:$0xff]
  %v621 = vld [vmem:[%s6 + $0x20] sm:$0xff]
  %v622 = vld [vmem:[%s6 + $0x28] sm:$0xff]
  %v623 = vld [vmem:[%s6 + $0x30] sm:$0xff]
  %v624 = vld [vmem:[%s6 + $0x38] sm:$0xff]
  %v625 = vld [vmem:[%s6 + $0x40] sm:$0xff]
  %v626 = vld [vmem:[%s6 + $0x48] sm:$0xff]
  %v627 = vld [vmem:[%s6 + $0x50] sm:$0xff]
  %v628 = vld [vmem:[%s6 + $0x58] sm:$0xff]
  %v629 = vld [vmem:[%s6 + $0x60] sm:$0xff]
  %v630 = vld [vmem:[%s6 + $0x68] sm:$0xff]
  %v631 = vld [vmem:[%s6 + $0x70] sm:$0xff]
  %v632 = vld [vmem:[%s6 + $0x78] sm:$0xff]
  %634 = vset.pattern.permute.xlu0 0
  %635 = vperm.xlu0 %634, %v617
  %v636 = vpop.permute.xlu0 %635
  %639 = vset.pattern.permute.xlu0 0
  %640 = vperm.xlu0 %639, %v618
  %v641 = vpop.permute.xlu0 %640
  %644 = vset.pattern.permute.xlu0 0
  %645 = vperm.xlu0 %644, %v619
  %v646 = vpop.permute.xlu0 %645
  %649 = vset.pattern.permute.xlu0 0
  %650 = vperm.xlu0 %649, %v620
  %v651 = vpop.permute.xlu0 %650
  %654 = vset.pattern.permute.xlu0 0
  %655 = vperm.xlu0 %654, %v621
  %v656 = vpop.permute.xlu0 %655
  %659 = vset.pattern.permute.xlu0 0
  %660 = vperm.xlu0 %659, %v622
  %v661 = vpop.permute.xlu0 %660
  %664 = vset.pattern.permute.xlu0 0
  %665 = vperm.xlu0 %664, %v623
  %v666 = vpop.permute.xlu0 %665
  %669 = vset.pattern.permute.xlu0 0
  %670 = vperm.xlu0 %669, %v624
  %v671 = vpop.permute.xlu0 %670
  %674 = vset.pattern.permute.xlu0 0
  %675 = vperm.xlu0 %674, %v625
  %v676 = vpop.permute.xlu0 %675
  %679 = vset.pattern.permute.xlu0 0
  %680 = vperm.xlu0 %679, %v626
  %v681 = vpop.permute.xlu0 %680
  %684 = vset.pattern.permute.xlu0 0
  %685 = vperm.xlu0 %684, %v627
  %v686 = vpop.permute.xlu0 %685
  %689 = vset.pattern.permute.xlu0 0
  %690 = vperm.xlu0 %689, %v628
  %v691 = vpop.permute.xlu0 %690
  %694 = vset.pattern.permute.xlu0 0
  %695 = vperm.xlu0 %694, %v629
  %v696 = vpop.permute.xlu0 %695
  %699 = vset.pattern.permute.xlu0 0
  %700 = vperm.xlu0 %699, %v630
  %v701 = vpop.permute.xlu0 %700
  %704 = vset.pattern.permute.xlu0 0
  %705 = vperm.xlu0 %704, %v631
  %v706 = vpop.permute.xlu0 %705
  %709 = vset.pattern.permute.xlu0 0
  %710 = vperm.xlu0 %709, %v632
  %v711 = vpop.permute.xlu0 %710
  %v729 = vunpack.c.l.b16 %v585
  %v730 = vunpack.c.h.b16 %v585
  %v731 = vunpack.c.l.b16 %v586
  %v732 = vunpack.c.h.b16 %v586
  %v733 = vunpack.c.l.b16 %v587
  %v734 = vunpack.c.h.b16 %v587
  %v735 = vunpack.c.l.b16 %v588
  %v736 = vunpack.c.h.b16 %v588
  %v737 = vunpack.c.l.b16 %v589
  %v738 = vunpack.c.h.b16 %v589
  %v739 = vunpack.c.l.b16 %v590
  %v740 = vunpack.c.h.b16 %v590
  %v741 = vunpack.c.l.b16 %v591
  %v742 = vunpack.c.h.b16 %v591
  %v743 = vunpack.c.l.b16 %v592
  %v744 = vunpack.c.h.b16 %v592
  %v745 = vunpack.c.l.b16 %v593
  %v746 = vunpack.c.h.b16 %v593
  %v747 = vunpack.c.l.b16 %v594
  %v748 = vunpack.c.h.b16 %v594
  %v749 = vunpack.c.l.b16 %v595
  %v750 = vunpack.c.h.b16 %v595
  %v751 = vunpack.c.l.b16 %v596
  %v752 = vunpack.c.h.b16 %v596
  %v753 = vunpack.c.l.b16 %v597
  %v754 = vunpack.c.h.b16 %v597
  %v755 = vunpack.c.l.b16 %v598
  %v756 = vunpack.c.h.b16 %v598
  %v757 = vunpack.c.l.b16 %v599
  %v758 = vunpack.c.h.b16 %v599
  %v759 = vunpack.c.l.b16 %v600
  %v760 = vunpack.c.h.b16 %v600
  %v761 = vpack.c.b16 %v731, %v729
  %v762 = vpack.c.b16 %v732, %v730
  %v763 = vpack.c.b16 %v735, %v733
  %v764 = vpack.c.b16 %v736, %v734
  %v765 = vpack.c.b16 %v739, %v737
  %v766 = vpack.c.b16 %v740, %v738
  %v767 = vpack.c.b16 %v743, %v741
  %v768 = vpack.c.b16 %v744, %v742
  %v769 = vpack.c.b16 %v747, %v745
  %v770 = vpack.c.b16 %v748, %v746
  %v771 = vpack.c.b16 %v751, %v749
  %v772 = vpack.c.b16 %v752, %v750
  %v773 = vpack.c.b16 %v755, %v753
  %v774 = vpack.c.b16 %v756, %v754
  %v775 = vpack.c.b16 %v759, %v757
  %v776 = vpack.c.b16 %v760, %v758
  %793 = vmatprep.subr.bf16.mxu0 0
  %794 = vmatpush1.bf16.msra.mxu0 %v601
  %795 = vmatprep.subr.bf16.mxu0 0
  %796 = vmatpush1.bf16.msra.mxu0 %v602
  %797 = vmatprep.subr.bf16.mxu0 0
  %798 = vmatpush1.bf16.msra.mxu0 %v603
  %799 = vmatprep.subr.bf16.mxu0 0
  %800 = vmatpush1.bf16.msra.mxu0 %v604
  %801 = vmatprep.subr.bf16.mxu0 0
  %802 = vmatpush1.bf16.msra.mxu0 %v605
  %803 = vmatprep.subr.bf16.mxu0 0
  %804 = vmatpush1.bf16.msra.mxu0 %v606
  %805 = vmatprep.subr.bf16.mxu0 0
  %806 = vmatpush1.bf16.msra.mxu0 %v607
  %807 = vmatprep.subr.bf16.mxu0 0
  %808 = vmatpush1.bf16.msra.mxu0 %v608
  %809 = vmatprep.subr.bf16.mxu0 0
  %810 = vmatpush1.bf16.msra.mxu0 %v609
  %811 = vmatprep.subr.bf16.mxu0 0
  %812 = vmatpush1.bf16.msra.mxu0 %v610
  %813 = vmatprep.subr.bf16.mxu0 0
  %814 = vmatpush1.bf16.msra.mxu0 %v611
  %815 = vmatprep.subr.bf16.mxu0 0
  %816 = vmatpush1.bf16.msra.mxu0 %v612
  %817 = vmatprep.subr.bf16.mxu0 0
  %818 = vmatpush1.bf16.msra.mxu0 %v613
  %819 = vmatprep.subr.bf16.mxu0 0
  %820 = vmatpush1.bf16.msra.mxu0 %v614
  %821 = vmatprep.subr.bf16.mxu0 0
  %822 = vmatpush1.bf16.msra.mxu0 %v615
  %823 = vmatprep.subr.bf16.mxu0 0
  %824 = vmatpush1.bf16.msra.mxu0 %v616
  %825 = vmatprep.mubr.bf16.mxu0 %v762
  %826 = vmatmul.mubr.bf16.gmra.mrb[0].mxu0 %v761
  %v827 = vpop.f32.mrb[0].mxu0
  %v828 = vadd.f32 %v636, %v827
  %v829 = vpop.f32.mrb[0].mxu0
  %v830 = vpop.f32.mrb[0].mxu0
  %v831 = vadd.f32 %v641, %v830
  %v832 = vpop.f32.mrb[0].mxu0
  %833 = vmatprep.mubr.bf16.mxu0 %v764
  %834 = vmatmul.mubr.bf16.gmra.mrb[0].mxu0 %v763
  %v835 = vpop.f32.mrb[0].mxu0
  %v836 = vadd.f32 %v646, %v835
  %v837 = vpop.f32.mrb[0].mxu0
  %v838 = vpop.f32.mrb[0].mxu0
  %v839 = vadd.f32 %v651, %v838
  %v840 = vpop.f32.mrb[0].mxu0
  %841 = vmatprep.mubr.bf16.mxu0 %v766
  %842 = vmatmul.mubr.bf16.gmra.mrb[0].mxu0 %v765
  %v843 = vpop.f32.mrb[0].mxu0
  %v844 = vadd.f32 %v656, %v843
  %v845 = vpop.f32.mrb[0].mxu0
  %v846 = vpop.f32.mrb[0].mxu0
  %v847 = vadd.f32 %v661, %v846
  %v848 = vpop.f32.mrb[0].mxu0
  %849 = vmatprep.mubr.bf16.mxu0 %v768
  %850 = vmatmul.mubr.bf16.gmra.mrb[0].mxu0 %v767
  %v851 = vpop.f32.mrb[0].mxu0
  %v852 = vadd.f32 %v666, %v851
  %v853 = vpop.f32.mrb[0].mxu0
  %v854 = vpop.f32.mrb[0].mxu0
  %v855 = vadd.f32 %v671, %v854
  %v856 = vpop.f32.mrb[0].mxu0
  %857 = vmatprep.mubr.bf16.mxu0 %v770
  %858 = vmatmul.mubr.bf16.gmra.mrb[0].mxu0 %v769
  %v859 = vpop.f32.mrb[0].mxu0
  %v860 = vadd.f32 %v676, %v859
  %v861 = vpop.f32.mrb[0].mxu0
  %v862 = vpop.f32.mrb[0].mxu0
  %v863 = vadd.f32 %v681, %v862
  %v864 = vpop.f32.mrb[0].mxu0
  %865 = vmatprep.mubr.bf16.mxu0 %v772
  %866 = vmatmul.mubr.bf16.gmra.mrb[0].mxu0 %v771
  %v867 = vpop.f32.mrb[0].mxu0
  %v868 = vadd.f32 %v686, %v867
  %v869 = vpop.f32.mrb[0].mxu0
  %v870 = vpop.f32.mrb[0].mxu0
  %v871 = vadd.f32 %v691, %v870
  %v872 = vpop.f32.mrb[0].mxu0
  %873 = vmatprep.mubr.bf16.mxu0 %v774
  %874 = vmatmul.mubr.bf16.gmra.mrb[0].mxu0 %v773
  %v875 = vpop.f32.mrb[0].mxu0
  %v876 = vadd.f32 %v696, %v875
  %v877 = vpop.f32.mrb[0].mxu0
  %v878 = vpop.f32.mrb[0].mxu0
  %v879 = vadd.f32 %v701, %v878
  %v880 = vpop.f32.mrb[0].mxu0
  %881 = vmatprep.mubr.bf16.mxu0 %v776
  %882 = vmatmul.mubr.bf16.gmra.mrb[0].mxu0 %v775
  %v883 = vpop.f32.mrb[0].mxu0
  %v884 = vadd.f32 %v706, %v883
  %v885 = vpop.f32.mrb[0].mxu0
  %v886 = vpop.f32.mrb[0].mxu0
  %v887 = vadd.f32 %v711, %v886
  %v888 = vpop.f32.mrb[0].mxu0
  %889 = vdwg.mxu0
  %v890 = vtanh.pop %v828
  %v891 = vtanh.pop %v831
  %v892 = vtanh.pop %v836
  %v893 = vtanh.pop %v839
  %v894 = vtanh.pop %v844
  %v895 = vtanh.pop %v847
  %v896 = vtanh.pop %v852
  %v897 = vtanh.pop %v855
  %v898 = vtanh.pop %v860
  %v899 = vtanh.pop %v863
  %v900 = vtanh.pop %v868
  %v901 = vtanh.pop %v871
  %v902 = vtanh.pop %v876
  %v903 = vtanh.pop %v879
  %v904 = vtanh.pop %v884
  %v905 = vtanh.pop %v887
  %v906 = vld [vmem:[%s7] sm:$0xf]
  %v907 = vld [vmem:[%s7 + $0x4] sm:$0xf]
  %v908 = vld [vmem:[%s7 + $0x8] sm:$0xf]
  %v909 = vld [vmem:[%s7 + $0xc] sm:$0xf]
  %v910 = vpack.c.bf16 %v891, %v890
  %v911 = vpack.c.bf16 %v893, %v892
  %v912 = vpack.c.bf16 %v895, %v894
  %v913 = vpack.c.bf16 %v897, %v896
  %v914 = vpack.c.bf16 %v899, %v898
  %v915 = vpack.c.bf16 %v901, %v900
  %v916 = vpack.c.bf16 %v903, %v902
  %v917 = vpack.c.bf16 %v905, %v904
  %v918 = vld [vmem:[%s8] sm:$0xff]
  %v919 = vld [vmem:[%s8 + $0x8] sm:$0xff]
  %v920 = vld [vmem:[%s8 + $0x10] sm:$0xff]
  %v921 = vld [vmem:[%s8 + $0x18] sm:$0xff]
  %923 = vset.pattern.permute.xlu0 0
  %924 = vperm.xlu0 %923, %v918
  %v925 = vpop.permute.xlu0 %924
  %928 = vset.pattern.permute.xlu0 0
  %929 = vperm.xlu0 %928, %v919
  %v930 = vpop.permute.xlu0 %929
  %933 = vset.pattern.permute.xlu0 0
  %934 = vperm.xlu0 %933, %v920
  %v935 = vpop.permute.xlu0 %934
  %938 = vset.pattern.permute.xlu0 0
  %939 = vperm.xlu0 %938, %v921
  %v940 = vpop.permute.xlu0 %939
  %v946 = vunpack.c.l.b16 %v906
  %v947 = vunpack.c.l.b16 %v907
  %v948 = vunpack.c.l.b16 %v908
  %v949 = vunpack.c.l.b16 %v909
  %v950 = vpack.c.b16 %v947, %v946
  %v951 = vpack.c.b16 %v949, %v948
  %954 = vmatprep.subr.bf16.mxu0 0
  %955 = vmatpush1.bf16.msra.mxu0 %v910
  %956 = vmatprep.subr.bf16.mxu0 0
  %957 = vmatpush1.bf16.msra.mxu0 %v911
  %958 = vmatprep.subr.bf16.mxu0 0
  %959 = vmatpush1.bf16.msra.mxu0 %v912
  %960 = vmatprep.subr.bf16.mxu0 0
  %961 = vmatpush1.bf16.msra.mxu0 %v913
  %962 = vmatprep.subr.bf16.mxu0 0
  %963 = vmatpush1.bf16.msra.mxu0 %v914
  %964 = vmatprep.subr.bf16.mxu0 0
  %965 = vmatpush1.bf16.msra.mxu0 %v915
  %966 = vmatprep.subr.bf16.mxu0 0
  %967 = vmatpush1.bf16.msra.mxu0 %v916
  %968 = vmatprep.subr.bf16.mxu0 0
  %969 = vmatpush1.bf16.msra.mxu0 %v917
  %970 = vmatprep.subr.bf16.mxu0 0
  %971 = vmatpush1.bf16.msra.mxu0 0
  %972 = vmatprep.subr.bf16.mxu0 0
  %973 = vmatpush1.bf16.msra.mxu0 0
  %974 = vmatprep.subr.bf16.mxu0 0
  %975 = vmatpush1.bf16.msra.mxu0 0
  %976 = vmatprep.subr.bf16.mxu0 0
  %977 = vmatpush1.bf16.msra.mxu0 0
  %978 = vmatprep.subr.bf16.mxu0 0
  %979 = vmatpush1.bf16.msra.mxu0 0
  %980 = vmatprep.subr.bf16.mxu0 0
  %981 = vmatpush1.bf16.msra.mxu0 0
  %982 = vmatprep.subr.bf16.mxu0 0
  %983 = vmatpush1.bf16.msra.mxu0 0
  %984 = vmatprep.subr.bf16.mxu0 0
  %985 = vmatpush1.bf16.msra.mxu0 0
  %986 = vmatprep.mubr.bf16.mxu0 0
  %987 = vmatmul.mubr.bf16.gmra.mrb[0].mxu0 %v950
  %v988 = vpop.f32.mrb[0].mxu0
  %v989 = vadd.f32 %v925, %v988
  %v990 = vpop.f32.mrb[0].mxu0
  %v991 = vpop.f32.mrb[0].mxu0
  %v992 = vadd.f32 %v930, %v991
  %v993 = vpop.f32.mrb[0].mxu0
  %994 = vmatprep.mubr.bf16.mxu0 0
  %995 = vmatmul.mubr.bf16.gmra.mrb[0].mxu0 %v951
  %v996 = vpop.f32.mrb[0].mxu0
  %v997 = vadd.f32 %v935, %v996
  %v998 = vpop.f32.mrb[0].mxu0
  %v999 = vpop.f32.mrb[0].mxu0
  %v1000 = vadd.f32 %v940, %v999
  %v1001 = vpop.f32.mrb[0].mxu0
  %1002 = vdwg.mxu0
  %v1003 = vmax.f32 %v997, 0.0
  %v1004 = vmax.f32 %v1000, 0.0
  %v1005 = vand.u32 2147483647, %v997
  %v1006 = vand.u32 2147483647, %v1000
  %v1007 = vsub.f32 0.0, %v1005
  %v1008 = vsub.f32 0.0, %v1006
  %v1009 = vmul.f32 %v1007, 1.442695
  %v1010 = vpow.pop %v1009
  %v1011 = vmul.f32 %v1008, 1.442695
  %v1012 = vpow.pop %v1011
  %v1013 = vadd.f32 %v1010, 1.0
  %v1014 = vlog2.pop %v1013
  %v1015 = vmul.f32 %v1014, 0.6931472
  %v1016 = vmul.f32 -0.5, %v1010
  %v1017 = vadd.f32 %v1016, 1.0
  %v1018 = vmul.f32 %v1017, %v1010
  %v1019 = vand.u32 2147483647, %v1010
  %vm1020 = vcmp.lt.f32.partialorder %v1019, 0.0004427343
  %v1021 = vsel %vm1020, %v1018, %v1015
  %v1022 = vadd.f32 %v1012, 1.0
  %v1023 = vlog2.pop %v1022
  %v1024 = vmul.f32 %v1023, 0.6931472
  %v1025 = vmul.f32 -0.5, %v1012
  %v1026 = vadd.f32 %v1025, 1.0
  %v1027 = vmul.f32 %v1026, %v1012
  %v1028 = vand.u32 2147483647, %v1012
  %vm1029 = vcmp.lt.f32.partialorder %v1028, 0.0004427343
  %v1030 = vsel %vm1029, %v1027, %v1024
  %v1031 = vadd.f32 %v1003, %v1021
  %v1032 = vadd.f32 %v1004, %v1030
  %v1033 = vmul.f32 %v1031, 10.0
  %v1034 = vmul.f32 %v1032, 10.0
  %v1035 = vmul.f32 %v1033, %v1033
  %v1036 = vmul.f32 %v1034, %v1034
  %v1037 = vrcp.pop %v1035
  %v1038 = vrcp.pop %v1036
  %v1039 = vmul.f32 %v1037, 0.5
  %v1040 = vmul.f32 %v1038, 0.5
  %v1041 = vld [vmem:[%s2] sm:$0xff]
  %v1042 = vld [vmem:[%s2 + $0x8] sm:$0xff]
  %v1043 = vld [vmem:[%s1] sm:$0xff]
  %v1044 = vld [vmem:[%s1 + $0x8] sm:$0xff]
  %v1046 = vsel %vm340, %v1041, 0
  %v1049 = vsel %vm340, %v1042, 0
  %v1052 = vsel %vm340, %v1043, 0
  %v1055 = vsel %vm340, %v1044, 0
  %1057 = vmatprep.subr.mxu0 0.0
  %v1058 = vand.u32 %v1052, 4294901760
  %1059 = vmatpush1.xpose.msra.mxu0 %v1058
  %1060 = vmatprep.subr.mxu0 0.0
  %v1061 = vand.u32 %v1055, 4294901760
  %1062 = vmatpush1.xpose.msra.mxu0 %v1061
  %1063 = vmatprep.subr.mxu0 0.0
  %1064 = vmatpush1.xpose.msra.mxu0 0.0
  %1065 = vmatprep.subr.mxu0 0.0
  %1066 = vmatpush1.xpose.msra.mxu0 0.0
  %1067 = vmatprep.subr.mxu0 0.0
  %1068 = vmatpush1.xpose.msra.mxu0 0.0
  %1069 = vmatprep.subr.mxu0 0.0
  %1070 = vmatpush1.xpose.msra.mxu0 0.0
  %1071 = vmatprep.subr.mxu0 0.0
  %1072 = vmatpush1.xpose.msra.mxu0 0.0
  %1073 = vmatprep.subr.mxu0 0.0
  %1074 = vmatpush1.xpose.msra.mxu0 0.0
  %1075 = vmatprep.subr.mxu0 0.0
  %1076 = vmatpush1.xpose.msra.mxu0 0.0
  %1077 = vmatprep.subr.mxu0 0.0
  %1078 = vmatpush1.xpose.msra.mxu0 0.0
  %1079 = vmatprep.subr.mxu0 0.0
  %1080 = vmatpush1.xpose.msra.mxu0 0.0
  %1081 = vmatprep.subr.mxu0 0.0
  %1082 = vmatpush1.xpose.msra.mxu0 0.0
  %1083 = vmatprep.subr.mxu0 0.0
  %1084 = vmatpush1.xpose.msra.mxu0 0.0
  %1085 = vmatprep.subr.mxu0 0.0
  %1086 = vmatpush1.xpose.msra.mxu0 0.0
  %1087 = vmatprep.subr.mxu0 0.0
  %1088 = vmatpush1.xpose.msra.mxu0 0.0
  %1089 = vmatprep.subr.mxu0 0.0
  %1090 = vmatpush1.xpose.msra.mxu0 0.0
  %1091 = vmatprep.subr.mxu0 0.0
  %1092 = vmatpush1.xpose.msra.mxu0 0.0
  %1093 = vmatprep.subr.mxu0 0.0
  %1094 = vmatpush1.xpose.msra.mxu0 0.0
  %1095 = vmatprep.subr.mxu0 0.0
  %1096 = vmatpush1.xpose.msra.mxu0 0.0
  %1097 = vmatprep.subr.mxu0 0.0
  %1098 = vmatpush1.xpose.msra.mxu0 0.0
  %1099 = vmatprep.subr.mxu0 0.0
  %1100 = vmatpush1.xpose.msra.mxu0 0.0
  %1101 = vmatprep.subr.mxu0 0.0
  %1102 = vmatpush1.xpose.msra.mxu0 0.0
  %1103 = vmatprep.subr.mxu0 0.0
  %1104 = vmatpush1.xpose.msra.mxu0 0.0
  %1105 = vmatprep.subr.mxu0 0.0
  %1106 = vmatpush1.xpose.msra.mxu0 0.0
  %1107 = vmatprep.subr.mxu0 0.0
  %1108 = vmatpush1.xpose.msra.mxu0 0.0
  %1109 = vmatprep.subr.mxu0 0.0
  %1110 = vmatpush1.xpose.msra.mxu0 0.0
  %1111 = vmatprep.subr.mxu0 0.0
  %1112 = vmatpush1.xpose.msra.mxu0 0.0
  %1113 = vmatprep.subr.mxu0 0.0
  %1114 = vmatpush1.xpose.msra.mxu0 0.0
  %1115 = vmatprep.subr.mxu0 0.0
  %1116 = vmatpush1.xpose.msra.mxu0 0.0
  %1117 = vmatprep.subr.mxu0 0.0
  %1118 = vmatpush1.xpose.msra.mxu0 0.0
  %1119 = vmatprep.subr.mxu0 0.0
  %1120 = vmatpush1.xpose.msra.mxu0 0.0
  %1121 = vmatprep.subr.mxu0 0.0
  %1122 = vmatpush1.xpose.msra.mxu0 0.0
  %1123 = vmatprep.mubr.f32.mxu0 0.0
  %v1124 = vand.u32 %v1046, 4294901760
  %v1125 = vsub.f32 %v1046, %v1124
  %v1126 = vand.u32 %v1125, 4294901760
  %v1127 = vsub.f32 %v1125, %v1126
  %v1128 = vand.u32 %v1127, 4294901760
  %1129 = vmatmul.mubr.f32.gmra.mrb[0].mxu0 %v1128
  %v1130 = vpop.f32.mrb[0].mxu0
  %v1131 = vadd.f32 0.0, %v1130
  %v1132 = vpop.f32.mrb[0].mxu0
  %1133 = vmatprep.mubr.f32.mxu0 0.0
  %v1134 = vand.u32 %v1049, 4294901760
  %v1135 = vsub.f32 %v1049, %v1134
  %v1136 = vand.u32 %v1135, 4294901760
  %v1137 = vsub.f32 %v1135, %v1136
  %v1138 = vand.u32 %v1137, 4294901760
  %1139 = vmatmul.mubr.f32.gmra.mrb[0].mxu0 %v1138
  %v1140 = vpop.f32.mrb[0].mxu0
  %v1141 = vadd.f32 0.0, %v1140
  %v1142 = vpop.f32.mrb[0].mxu0
  %1143 = vdwg.mxu0
  %1144 = vmatprep.subr.mxu0 0.0
  %v1145 = vand.u32 %v1052, 4294901760
  %v1146 = vsub.f32 %v1052, %v1145
  %v1147 = vand.u32 %v1146, 4294901760
  %v1148 = vsub.f32 %v1146, %v1147
  %v1149 = vand.u32 %v1148, 4294901760
  %1150 = vmatpush1.xpose.msra.mxu0 %v1149
  %1151 = vmatprep.subr.mxu0 0.0
  %v1152 = vand.u32 %v1055, 4294901760
  %v1153 = vsub.f32 %v1055, %v1152
  %v1154 = vand.u32 %v1153, 4294901760
  %v1155 = vsub.f32 %v1153, %v1154
  %v1156 = vand.u32 %v1155, 4294901760
  %1157 = vmatpush1.xpose.msra.mxu0 %v1156
  %1158 = vmatprep.subr.mxu0 0.0
  %1159 = vmatpush1.xpose.msra.mxu0 0.0
  %1160 = vmatprep.subr.mxu0 0.0
  %1161 = vmatpush1.xpose.msra.mxu0 0.0
  %1162 = vmatprep.subr.mxu0 0.0
  %1163 = vmatpush1.xpose.msra.mxu0 0.0
  %1164 = vmatprep.subr.mxu0 0.0
  %1165 = vmatpush1.xpose.msra.mxu0 0.0
  %1166 = vmatprep.subr.mxu0 0.0
  %1167 = vmatpush1.xpose.msra.mxu0 0.0
  %1168 = vmatprep.subr.mxu0 0.0
  %1169 = vmatpush1.xpose.msra.mxu0 0.0
  %1170 = vmatprep.subr.mxu0 0.0
  %1171 = vmatpush1.xpose.msra.mxu0 0.0
  %1172 = vmatprep.subr.mxu0 0.0
  %1173 = vmatpush1.xpose.msra.mxu0 0.0
  %1174 = vmatprep.subr.mxu0 0.0
  %1175 = vmatpush1.xpose.msra.mxu0 0.0
  %1176 = vmatprep.subr.mxu0 0.0
  %1177 = vmatpush1.xpose.msra.mxu0 0.0
  %1178 = vmatprep.subr.mxu0 0.0
  %1179 = vmatpush1.xpose.msra.mxu0 0.0
  %1180 = vmatprep.subr.mxu0 0.0
  %1181 = vmatpush1.xpose.msra.mxu0 0.0
  %1182 = vmatprep.subr.mxu0 0.0
  %1183 = vmatpush1.xpose.msra.mxu0 0.0
  %1184 = vmatprep.subr.mxu0 0.0
  %1185 = vmatpush1.xpose.msra.mxu0 0.0
  %1186 = vmatprep.subr.mxu0 0.0
  %1187 = vmatpush1.xpose.msra.mxu0 0.0
  %1188 = vmatprep.subr.mxu0 0.0
  %1189 = vmatpush1.xpose.msra.mxu0 0.0
  %1190 = vmatprep.subr.mxu0 0.0
  %1191 = vmatpush1.xpose.msra.mxu0 0.0
  %1192 = vmatprep.subr.mxu0 0.0
  %1193 = vmatpush1.xpose.msra.mxu0 0.0
  %1194 = vmatprep.subr.mxu0 0.0
  %1195 = vmatpush1.xpose.msra.mxu0 0.0
  %1196 = vmatprep.subr.mxu0 0.0
  %1197 = vmatpush1.xpose.msra.mxu0 0.0
  %1198 = vmatprep.subr.mxu0 0.0
  %1199 = vmatpush1.xpose.msra.mxu0 0.0
  %1200 = vmatprep.subr.mxu0 0.0
  %1201 = vmatpush1.xpose.msra.mxu0 0.0
  %1202 = vmatprep.subr.mxu0 0.0
  %1203 = vmatpush1.xpose.msra.mxu0 0.0
  %1204 = vmatprep.subr.mxu0 0.0
  %1205 = vmatpush1.xpose.msra.mxu0 0.0
  %1206 = vmatprep.subr.mxu0 0.0
  %1207 = vmatpush1.xpose.msra.mxu0 0.0
  %1208 = vmatprep.subr.mxu0 0.0
  %1209 = vmatpush1.xpose.msra.mxu0 0.0
  %1210 = vmatprep.subr.mxu0 0.0
  %1211 = vmatpush1.xpose.msra.mxu0 0.0
  %1212 = vmatprep.subr.mxu0 0.0
  %1213 = vmatpush1.xpose.msra.mxu0 0.0
  %1214 = vmatprep.subr.mxu0 0.0
  %1215 = vmatpush1.xpose.msra.mxu0 0.0
  %1216 = vmatprep.subr.mxu0 0.0
  %1217 = vmatpush1.xpose.msra.mxu0 0.0
  %1218 = vmatprep.mubr.f32.mxu0 0.0
  %v1219 = vand.u32 %v1046, 4294901760
  %1220 = vmatmul.mubr.f32.gmra.mrb[0].mxu0 %v1219
  %v1221 = vpop.f32.mrb[0].mxu0
  %v1222 = vadd.f32 %v1131, %v1221
  %v1223 = vpop.f32.mrb[0].mxu0
  %1224 = vmatprep.mubr.f32.mxu0 0.0
  %v1225 = vand.u32 %v1049, 4294901760
  %1226 = vmatmul.mubr.f32.gmra.mrb[0].mxu0 %v1225
  %v1227 = vpop.f32.mrb[0].mxu0
  %v1228 = vadd.f32 %v1141, %v1227
  %v1229 = vpop.f32.mrb[0].mxu0
  %1230 = vdwg.mxu0
  %1231 = vmatprep.subr.mxu0 0.0
  %v1232 = vand.u32 %v1052, 4294901760
  %v1233 = vsub.f32 %v1052, %v1232
  %1234 = vmatpush1.xpose.msra.mxu0 %v1233
  %1235 = vmatprep.subr.mxu0 0.0
  %v1236 = vand.u32 %v1055, 4294901760
  %v1237 = vsub.f32 %v1055, %v1236
  %1238 = vmatpush1.xpose.msra.mxu0 %v1237
  %1239 = vmatprep.subr.mxu0 0.0
  %1240 = vmatpush1.xpose.msra.mxu0 0.0
  %1241 = vmatprep.subr.mxu0 0.0
  %1242 = vmatpush1.xpose.msra.mxu0 0.0
  %1243 = vmatprep.subr.mxu0 0.0
  %1244 = vmatpush1.xpose.msra.mxu0 0.0
  %1245 = vmatprep.subr.mxu0 0.0
  %1246 = vmatpush1.xpose.msra.mxu0 0.0
  %1247 = vmatprep.subr.mxu0 0.0
  %1248 = vmatpush1.xpose.msra.mxu0 0.0
  %1249 = vmatprep.subr.mxu0 0.0
  %1250 = vmatpush1.xpose.msra.mxu0 0.0
  %1251 = vmatprep.subr.mxu0 0.0
  %1252 = vmatpush1.xpose.msra.mxu0 0.0
  %1253 = vmatprep.subr.mxu0 0.0
  %1254 = vmatpush1.xpose.msra.mxu0 0.0
  %1255 = vmatprep.subr.mxu0 0.0
  %1256 = vmatpush1.xpose.msra.mxu0 0.0
  %1257 = vmatprep.subr.mxu0 0.0
  %1258 = vmatpush1.xpose.msra.mxu0 0.0
  %1259 = vmatprep.subr.mxu0 0.0
  %1260 = vmatpush1.xpose.msra.mxu0 0.0
  %1261 = vmatprep.subr.mxu0 0.0
  %1262 = vmatpush1.xpose.msra.mxu0 0.0
  %1263 = vmatprep.subr.mxu0 0.0
  %1264 = vmatpush1.xpose.msra.mxu0 0.0
  %1265 = vmatprep.subr.mxu0 0.0
  %1266 = vmatpush1.xpose.msra.mxu0 0.0
  %1267 = vmatprep.subr.mxu0 0.0
  %1268 = vmatpush1.xpose.msra.mxu0 0.0
  %1269 = vmatprep.subr.mxu0 0.0
  %1270 = vmatpush1.xpose.msra.mxu0 0.0
  %1271 = vmatprep.subr.mxu0 0.0
  %1272 = vmatpush1.xpose.msra.mxu0 0.0
  %1273 = vmatprep.subr.mxu0 0.0
  %1274 = vmatpush1.xpose.msra.mxu0 0.0
  %1275 = vmatprep.subr.mxu0 0.0
  %1276 = vmatpush1.xpose.msra.mxu0 0.0
  %1277 = vmatprep.subr.mxu0 0.0
  %1278 = vmatpush1.xpose.msra.mxu0 0.0
  %1279 = vmatprep.subr.mxu0 0.0
  %1280 = vmatpush1.xpose.msra.mxu0 0.0
  %1281 = vmatprep.subr.mxu0 0.0
  %1282 = vmatpush1.xpose.msra.mxu0 0.0
  %1283 = vmatprep.subr.mxu0 0.0
  %1284 = vmatpush1.xpose.msra.mxu0 0.0
  %1285 = vmatprep.subr.mxu0 0.0
  %1286 = vmatpush1.xpose.msra.mxu0 0.0
  %1287 = vmatprep.subr.mxu0 0.0
  %1288 = vmatpush1.xpose.msra.mxu0 0.0
  %1289 = vmatprep.subr.mxu0 0.0
  %1290 = vmatpush1.xpose.msra.mxu0 0.0
  %1291 = vmatprep.subr.mxu0 0.0
  %1292 = vmatpush1.xpose.msra.mxu0 0.0
  %1293 = vmatprep.subr.mxu0 0.0
  %1294 = vmatpush1.xpose.msra.mxu0 0.0
  %1295 = vmatprep.subr.mxu0 0.0
  %1296 = vmatpush1.xpose.msra.mxu0 0.0
  %1297 = vmatprep.subr.mxu0 0.0
  %1298 = vmatpush1.xpose.msra.mxu0 0.0
  %1299 = vmatprep.mubr.f32.mxu0 0.0
  %v1300 = vand.u32 %v1046, 4294901760
  %v1301 = vsub.f32 %v1046, %v1300
  %1302 = vmatmul.mubr.f32.gmra.mrb[0].mxu0 %v1301
  %v1303 = vpop.f32.mrb[0].mxu0
  %v1304 = vadd.f32 %v1222, %v1303
  %v1305 = vpop.f32.mrb[0].mxu0
  %1306 = vmatprep.mubr.f32.mxu0 0.0
  %v1307 = vand.u32 %v1049, 4294901760
  %v1308 = vsub.f32 %v1049, %v1307
  %1309 = vmatmul.mubr.f32.gmra.mrb[0].mxu0 %v1308
  %v1310 = vpop.f32.mrb[0].mxu0
  %v1311 = vadd.f32 %v1228, %v1310
  %v1312 = vpop.f32.mrb[0].mxu0
  %1313 = vdwg.mxu0
  %1314 = vmatprep.subr.mxu0 0.0
  %v1315 = vand.u32 %v1052, 4294901760
  %1316 = vmatpush1.xpose.msra.mxu0 %v1315
  %1317 = vmatprep.subr.mxu0 0.0
  %v1318 = vand.u32 %v1055, 4294901760
  %1319 = vmatpush1.xpose.msra.mxu0 %v1318
  %1320 = vmatprep.subr.mxu0 0.0
  %1321 = vmatpush1.xpose.msra.mxu0 0.0
  %1322 = vmatprep.subr.mxu0 0.0
  %1323 = vmatpush1.xpose.msra.mxu0 0.0
  %1324 = vmatprep.subr.mxu0 0.0
  %1325 = vmatpush1.xpose.msra.mxu0 0.0
  %1326 = vmatprep.subr.mxu0 0.0
  %1327 = vmatpush1.xpose.msra.mxu0 0.0
  %1328 = vmatprep.subr.mxu0 0.0
  %1329 = vmatpush1.xpose.msra.mxu0 0.0
  %1330 = vmatprep.subr.mxu0 0.0
  %1331 = vmatpush1.xpose.msra.mxu0 0.0
  %1332 = vmatprep.subr.mxu0 0.0
  %1333 = vmatpush1.xpose.msra.mxu0 0.0
  %1334 = vmatprep.subr.mxu0 0.0
  %1335 = vmatpush1.xpose.msra.mxu0 0.0
  %1336 = vmatprep.subr.mxu0 0.0
  %1337 = vmatpush1.xpose.msra.mxu0 0.0
  %1338 = vmatprep.subr.mxu0 0.0
  %1339 = vmatpush1.xpose.msra.mxu0 0.0
  %1340 = vmatprep.subr.mxu0 0.0
  %1341 = vmatpush1.xpose.msra.mxu0 0.0
  %1342 = vmatprep.subr.mxu0 0.0
  %1343 = vmatpush1.xpose.msra.mxu0 0.0
  %1344 = vmatprep.subr.mxu0 0.0
  %1345 = vmatpush1.xpose.msra.mxu0 0.0
  %1346 = vmatprep.subr.mxu0 0.0
  %1347 = vmatpush1.xpose.msra.mxu0 0.0
  %1348 = vmatprep.subr.mxu0 0.0
  %1349 = vmatpush1.xpose.msra.mxu0 0.0
  %1350 = vmatprep.subr.mxu0 0.0
  %1351 = vmatpush1.xpose.msra.mxu0 0.0
  %1352 = vmatprep.subr.mxu0 0.0
  %1353 = vmatpush1.xpose.msra.mxu0 0.0
  %1354 = vmatprep.subr.mxu0 0.0
  %1355 = vmatpush1.xpose.msra.mxu0 0.0
  %1356 = vmatprep.subr.mxu0 0.0
  %1357 = vmatpush1.xpose.msra.mxu0 0.0
  %1358 = vmatprep.subr.mxu0 0.0
  %1359 = vmatpush1.xpose.msra.mxu0 0.0
  %1360 = vmatprep.subr.mxu0 0.0
  %1361 = vmatpush1.xpose.msra.mxu0 0.0
  %1362 = vmatprep.subr.mxu0 0.0
  %1363 = vmatpush1.xpose.msra.mxu0 0.0
  %1364 = vmatprep.subr.mxu0 0.0
  %1365 = vmatpush1.xpose.msra.mxu0 0.0
  %1366 = vmatprep.subr.mxu0 0.0
  %1367 = vmatpush1.xpose.msra.mxu0 0.0
  %1368 = vmatprep.subr.mxu0 0.0
  %1369 = vmatpush1.xpose.msra.mxu0 0.0
  %1370 = vmatprep.subr.mxu0 0.0
  %1371 = vmatpush1.xpose.msra.mxu0 0.0
  %1372 = vmatprep.subr.mxu0 0.0
  %1373 = vmatpush1.xpose.msra.mxu0 0.0
  %1374 = vmatprep.subr.mxu0 0.0
  %1375 = vmatpush1.xpose.msra.mxu0 0.0
  %1376 = vmatprep.subr.mxu0 0.0
  %1377 = vmatpush1.xpose.msra.mxu0 0.0
  %1378 = vmatprep.subr.mxu0 0.0
  %1379 = vmatpush1.xpose.msra.mxu0 0.0
  %1380 = vmatprep.mubr.f32.mxu0 0.0
  %v1381 = vand.u32 %v1046, 4294901760
  %v1382 = vsub.f32 %v1046, %v1381
  %v1383 = vand.u32 %v1382, 4294901760
  %1384 = vmatmul.mubr.f32.gmra.mrb[0].mxu0 %v1383
  %v1385 = vpop.f32.mrb[0].mxu0
  %v1386 = vadd.f32 %v1304, %v1385
  %v1387 = vpop.f32.mrb[0].mxu0
  %1388 = vmatprep.mubr.f32.mxu0 0.0
  %v1389 = vand.u32 %v1049, 4294901760
  %v1390 = vsub.f32 %v1049, %v1389
  %v1391 = vand.u32 %v1390, 4294901760
  %1392 = vmatmul.mubr.f32.gmra.mrb[0].mxu0 %v1391
  %v1393 = vpop.f32.mrb[0].mxu0
  %v1394 = vadd.f32 %v1311, %v1393
  %v1395 = vpop.f32.mrb[0].mxu0
  %1396 = vdwg.mxu0
  %1397 = vmatprep.subr.mxu0 0.0
  %v1398 = vand.u32 %v1052, 4294901760
  %v1399 = vsub.f32 %v1052, %v1398
  %v1400 = vand.u32 %v1399, 4294901760
  %1401 = vmatpush1.xpose.msra.mxu0 %v1400
  %1402 = vmatprep.subr.mxu0 0.0
  %v1403 = vand.u32 %v1055, 4294901760
  %v1404 = vsub.f32 %v1055, %v1403
  %v1405 = vand.u32 %v1404, 4294901760
  %1406 = vmatpush1.xpose.msra.mxu0 %v1405
  %1407 = vmatprep.subr.mxu0 0.0
  %1408 = vmatpush1.xpose.msra.mxu0 0.0
  %1409 = vmatprep.subr.mxu0 0.0
  %1410 = vmatpush1.xpose.msra.mxu0 0.0
  %1411 = vmatprep.subr.mxu0 0.0
  %1412 = vmatpush1.xpose.msra.mxu0 0.0
  %1413 = vmatprep.subr.mxu0 0.0
  %1414 = vmatpush1.xpose.msra.mxu0 0.0
  %1415 = vmatprep.subr.mxu0 0.0
  %1416 = vmatpush1.xpose.msra.mxu0 0.0
  %1417 = vmatprep.subr.mxu0 0.0
  %1418 = vmatpush1.xpose.msra.mxu0 0.0
  %1419 = vmatprep.subr.mxu0 0.0
  %1420 = vmatpush1.xpose.msra.mxu0 0.0
  %1421 = vmatprep.subr.mxu0 0.0
  %1422 = vmatpush1.xpose.msra.mxu0 0.0
  %1423 = vmatprep.subr.mxu0 0.0
  %1424 = vmatpush1.xpose.msra.mxu0 0.0
  %1425 = vmatprep.subr.mxu0 0.0
  %1426 = vmatpush1.xpose.msra.mxu0 0.0
  %1427 = vmatprep.subr.mxu0 0.0
  %1428 = vmatpush1.xpose.msra.mxu0 0.0
  %1429 = vmatprep.subr.mxu0 0.0
  %1430 = vmatpush1.xpose.msra.mxu0 0.0
  %1431 = vmatprep.subr.mxu0 0.0
  %1432 = vmatpush1.xpose.msra.mxu0 0.0
  %1433 = vmatprep.subr.mxu0 0.0
  %1434 = vmatpush1.xpose.msra.mxu0 0.0
  %1435 = vmatprep.subr.mxu0 0.0
  %1436 = vmatpush1.xpose.msra.mxu0 0.0
  %1437 = vmatprep.subr.mxu0 0.0
  %1438 = vmatpush1.xpose.msra.mxu0 0.0
  %1439 = vmatprep.subr.mxu0 0.0
  %1440 = vmatpush1.xpose.msra.mxu0 0.0
  %1441 = vmatprep.subr.mxu0 0.0
  %1442 = vmatpush1.xpose.msra.mxu0 0.0
  %1443 = vmatprep.subr.mxu0 0.0
  %1444 = vmatpush1.xpose.msra.mxu0 0.0
  %1445 = vmatprep.subr.mxu0 0.0
  %1446 = vmatpush1.xpose.msra.mxu0 0.0
  %1447 = vmatprep.subr.mxu0 0.0
  %1448 = vmatpush1.xpose.msra.mxu0 0.0
  %1449 = vmatprep.subr.mxu0 0.0
  %1450 = vmatpush1.xpose.msra.mxu0 0.0
  %1451 = vmatprep.subr.mxu0 0.0
  %1452 = vmatpush1.xpose.msra.mxu0 0.0
  %1453 = vmatprep.subr.mxu0 0.0
  %1454 = vmatpush1.xpose.msra.mxu0 0.0
  %1455 = vmatprep.subr.mxu0 0.0
  %1456 = vmatpush1.xpose.msra.mxu0 0.0
  %1457 = vmatprep.subr.mxu0 0.0
  %1458 = vmatpush1.xpose.msra.mxu0 0.0
  %1459 = vmatprep.subr.mxu0 0.0
  %1460 = vmatpush1.xpose.msra.mxu0 0.0
  %1461 = vmatprep.subr.mxu0 0.0
  %1462 = vmatpush1.xpose.msra.mxu0 0.0
  %1463 = vmatprep.subr.mxu0 0.0
  %1464 = vmatpush1.xpose.msra.mxu0 0.0
  %1465 = vmatprep.subr.mxu0 0.0
  %1466 = vmatpush1.xpose.msra.mxu0 0.0
  %1467 = vmatprep.mubr.f32.mxu0 0.0
  %v1468 = vand.u32 %v1046, 4294901760
  %1469 = vmatmul.mubr.f32.gmra.mrb[0].mxu0 %v1468
  %v1470 = vpop.f32.mrb[0].mxu0
  %v1471 = vadd.f32 %v1386, %v1470
  %v1472 = vpop.f32.mrb[0].mxu0
  %1473 = vmatprep.mubr.f32.mxu0 0.0
  %v1474 = vand.u32 %v1049, 4294901760
  %1475 = vmatmul.mubr.f32.gmra.mrb[0].mxu0 %v1474
  %v1476 = vpop.f32.mrb[0].mxu0
  %v1477 = vadd.f32 %v1394, %v1476
  %v1478 = vpop.f32.mrb[0].mxu0
  %1479 = vdwg.mxu0
  %1480 = vmatprep.subr.mxu0 0.0
  %v1481 = vand.u32 %v1052, 4294901760
  %1482 = vmatpush1.xpose.msra.mxu0 %v1481
  %1483 = vmatprep.subr.mxu0 0.0
  %v1484 = vand.u32 %v1055, 4294901760
  %1485 = vmatpush1.xpose.msra.mxu0 %v1484
  %1486 = vmatprep.subr.mxu0 0.0
  %1487 = vmatpush1.xpose.msra.mxu0 0.0
  %1488 = vmatprep.subr.mxu0 0.0
  %1489 = vmatpush1.xpose.msra.mxu0 0.0
  %1490 = vmatprep.subr.mxu0 0.0
  %1491 = vmatpush1.xpose.msra.mxu0 0.0
  %1492 = vmatprep.subr.mxu0 0.0
  %1493 = vmatpush1.xpose.msra.mxu0 0.0
  %1494 = vmatprep.subr.mxu0 0.0
  %1495 = vmatpush1.xpose.msra.mxu0 0.0
  %1496 = vmatprep.subr.mxu0 0.0
  %1497 = vmatpush1.xpose.msra.mxu0 0.0
  %1498 = vmatprep.subr.mxu0 0.0
  %1499 = vmatpush1.xpose.msra.mxu0 0.0
  %1500 = vmatprep.subr.mxu0 0.0
  %1501 = vmatpush1.xpose.msra.mxu0 0.0
  %1502 = vmatprep.subr.mxu0 0.0
  %1503 = vmatpush1.xpose.msra.mxu0 0.0
  %1504 = vmatprep.subr.mxu0 0.0
  %1505 = vmatpush1.xpose.msra.mxu0 0.0
  %1506 = vmatprep.subr.mxu0 0.0
  %1507 = vmatpush1.xpose.msra.mxu0 0.0
  %1508 = vmatprep.subr.mxu0 0.0
  %1509 = vmatpush1.xpose.msra.mxu0 0.0
  %1510 = vmatprep.subr.mxu0 0.0
  %1511 = vmatpush1.xpose.msra.mxu0 0.0
  %1512 = vmatprep.subr.mxu0 0.0
  %1513 = vmatpush1.xpose.msra.mxu0 0.0
  %1514 = vmatprep.subr.mxu0 0.0
  %1515 = vmatpush1.xpose.msra.mxu0 0.0
  %1516 = vmatprep.subr.mxu0 0.0
  %1517 = vmatpush1.xpose.msra.mxu0 0.0
  %1518 = vmatprep.subr.mxu0 0.0
  %1519 = vmatpush1.xpose.msra.mxu0 0.0
  %1520 = vmatprep.subr.mxu0 0.0
  %1521 = vmatpush1.xpose.msra.mxu0 0.0
  %1522 = vmatprep.subr.mxu0 0.0
  %1523 = vmatpush1.xpose.msra.mxu0 0.0
  %1524 = vmatprep.subr.mxu0 0.0
  %1525 = vmatpush1.xpose.msra.mxu0 0.0
  %1526 = vmatprep.subr.mxu0 0.0
  %1527 = vmatpush1.xpose.msra.mxu0 0.0
  %1528 = vmatprep.subr.mxu0 0.0
  %1529 = vmatpush1.xpose.msra.mxu0 0.0
  %1530 = vmatprep.subr.mxu0 0.0
  %1531 = vmatpush1.xpose.msra.mxu0 0.0
  %1532 = vmatprep.subr.mxu0 0.0
  %1533 = vmatpush1.xpose.msra.mxu0 0.0
  %1534 = vmatprep.subr.mxu0 0.0
  %1535 = vmatpush1.xpose.msra.mxu0 0.0
  %1536 = vmatprep.subr.mxu0 0.0
  %1537 = vmatpush1.xpose.msra.mxu0 0.0
  %1538 = vmatprep.subr.mxu0 0.0
  %1539 = vmatpush1.xpose.msra.mxu0 0.0
  %1540 = vmatprep.subr.mxu0 0.0
  %1541 = vmatpush1.xpose.msra.mxu0 0.0
  %1542 = vmatprep.subr.mxu0 0.0
  %1543 = vmatpush1.xpose.msra.mxu0 0.0
  %1544 = vmatprep.subr.mxu0 0.0
  %1545 = vmatpush1.xpose.msra.mxu0 0.0
  %1546 = vmatprep.mubr.f32.mxu0 0.0
  %v1547 = vand.u32 %v1046, 4294901760
  %1548 = vmatmul.mubr.f32.gmra.mrb[0].mxu0 %v1547
  %v1549 = vpop.f32.mrb[0].mxu0
  %v1550 = vadd.f32 %v1471, %v1549
  %v1551 = vpop.f32.mrb[0].mxu0
  %1552 = vmatprep.mubr.f32.mxu0 0.0
  %v1553 = vand.u32 %v1049, 4294901760
  %1554 = vmatmul.mubr.f32.gmra.mrb[0].mxu0 %v1553
  %v1555 = vpop.f32.mrb[0].mxu0
  %v1556 = vadd.f32 %v1477, %v1555
  %v1557 = vpop.f32.mrb[0].mxu0
  %1558 = vdwg.mxu0
  %v1559 = vsub.f32 %v1550, %v989
  %v1560 = vsub.f32 %v1556, %v992
  %v1561 = vmul.f32 %v1559, %v1559
  %v1562 = vmul.f32 %v1560, %v1560
  %v1563 = vmul.f32 %v1561, %v1039
  %v1564 = vmul.f32 %v1562, %v1040
  %v1565 = vlog2.pop %v1033
  %v1566 = vmul.f32 %v1565, 0.6931472
  %v1567 = vlog2.pop %v1034
  %v1568 = vmul.f32 %v1567, 0.6931472
  %v1569 = vadd.f32 %v1563, %v1566
  %v1570 = vadd.f32 %v1564, %v1568
  %v1571 = vsel %vm340, %v1569, 0.0
  %v1572 = vsel %vm340, %v1570, 0.0
  %v1573 = vadd.f32 %v1571, %v1572
  %v1574 = vrot.slane %v1573, 4
  %v1575 = vadd.f32 %v1573, %v1574
  %v1576 = vrot.slane %v1575, 2
  %v1577 = vadd.f32 %v1575, %v1576
  %v1578 = vrot.slane %v1577, 1
  %v1579 = vadd.f32 %v1577, %v1578
  %v1580 = vmul.f32 %v1579, 0.0625
  %vm1581 = vcmask 122880
  %1582 = vst.msk [vmem:[%s9] sm:$0x1] %vm1581, %v1580
  // Predicated region
  $region38: #{_forward_impl.1} parent=0 // pred_check
    _
  $region39: #{_forward_impl.1} parent=0 // pred_check_branch
    %1584 = sbr.rel (0) target = $region41
  $region40: #{_forward_impl.1} parent=0 // pred_region
    _
  $region41: #{_forward_impl.1} parent=0 // pred_fallthru
    _
  // Predicated region
  $region42: #{_forward_impl.1} parent=0 // pred_check
    _
  $region43: #{_forward_impl.1} parent=0 // pred_check_branch
    %1586 = sbr.rel (0) target = $region45
  $region44: #{_forward_impl.1} parent=0 // pred_region
    _
  $region45: #{_forward_impl.1} parent=0 // pred_fallthru
    _

</llo_original>
